<compile_context>
chip_gen: v6e
topology: v6e:2x2x1
jax: 0.10.0
libtpu: 0.0.40
codegen_flags: <defaults>
</compile_context>

<pallas_src>
import functools

import jax
import jax.numpy as jnp
from jax.experimental import pallas as pl
from jax.experimental.pallas import tpu as pltpu

EPS = 1e-5


def _round_up(x, m):
    return ((x + m - 1) // m) * m


def _pad2d(a, rows, cols):
    r, c = a.shape
    return jnp.pad(a, ((0, rows - r), (0, cols - c)))


# ----------------------------------------------------------------------------
# Pallas kernel: tiled matmul + folded-BN epilogue (+ optional relu / residual)
# ----------------------------------------------------------------------------
def _make_mm_bn_kernel(with_residual: bool, relu_out: bool):
    """out = [relu]( x @ w * scale + shift )                    (no residual)
       out = relu( relu(x @ w * scale + shift) + residual )     (with residual)"""

    def kernel(x_ref, w_ref, scale_ref, shift_ref, *rest):
        if with_residual:
            res_ref, o_ref, acc_ref = rest
        else:
            o_ref, acc_ref = rest

        @pl.when(pl.program_id(2) == 0)
        def _init():
            acc_ref[...] = jnp.zeros_like(acc_ref)

        # bf16 x bf16 -> f32 accumulation on the MXU.
        acc_ref[...] += jnp.dot(x_ref[...], w_ref[...],
                                preferred_element_type=jnp.float32)

        @pl.when(pl.program_id(2) == pl.num_programs(2) - 1)
        def _finalize():
            y = acc_ref[...] * scale_ref[...] + shift_ref[...]
            if relu_out:
                y = jnp.maximum(y, 0.0)
            if with_residual:
                # Module semantics: out = relu(bn2(conv2(.))); out += residual; relu(out)
                y = jnp.maximum(y + res_ref[...], 0.0)
            o_ref[...] = y.astype(o_ref.dtype)

    return kernel


def fused_matmul_bn(x, w, scale, shift, residual=None, relu_out=True,
                    tm=256, tn=256, tk=128):
    """Tiled (M,K)@(K,N) matmul with folded-BN epilogue.

    x: (M, K) f32, w: (K, N) f32, scale/shift: (N,) f32, residual: (M, N) f32 or None.
    Pads M to a multiple of tm (sublane-aligned) and K/N to multiples of 128 (lane-dense).
    """
    M, K = x.shape
    Kw, N = w.shape
    assert K == Kw
    with_residual = residual is not None

    # Clamp tiles to the (aligned) problem size; keep (8, 128) alignment.
    tm = max(8, min(tm, _round_up(M, 8)))
    tn = max(128, min(tn, _round_up(N, 128)))
    tk = max(128, min(tk, _round_up(K, 128)))
    Mp, Kp, Np = _round_up(M, tm), _round_up(K, tk), _round_up(N, tn)

    xp = _pad2d(x, Mp, Kp).astype(jnp.bfloat16)
    wp = _pad2d(w, Kp, Np).astype(jnp.bfloat16)
    sp = _pad2d(scale.reshape(1, N).astype(jnp.float32), 1, Np)
    bp = _pad2d(shift.reshape(1, N).astype(jnp.float32), 1, Np)

    grid = (Mp // tm, Np // tn, Kp // tk)

    in_specs = [
        pl.BlockSpec((tm, tk), lambda i, j, k: (i, k)),
        pl.BlockSpec((tk, tn), lambda i, j, k: (k, j)),
        pl.BlockSpec((1, tn), lambda i, j, k: (0, j)),
        pl.BlockSpec((1, tn), lambda i, j, k: (0, j)),
    ]
    args = [xp, wp, sp, bp]
    if with_residual:
        in_specs.append(pl.BlockSpec((tm, tn), lambda i, j, k: (i, j)))
        args.append(_pad2d(residual.astype(jnp.float32), Mp, Np))

    flops = 2 * Mp * Np * Kp
    bytes_accessed = 2 * Mp * Kp + 2 * Kp * Np + 4 * Mp * Np + 8 * Np
    if with_residual:
        bytes_accessed += 4 * Mp * Np

    out = pl.pallas_call(
        _make_mm_bn_kernel(with_residual, relu_out),
        out_shape=jax.ShapeDtypeStruct((Mp, Np), jnp.float32),
        grid=grid,
        in_specs=in_specs,
        out_specs=pl.BlockSpec((tm, tn), lambda i, j, k: (i, j)),
        scratch_shapes=[pltpu.VMEM((tm, tn), jnp.float32)],
        compiler_params=pltpu.CompilerParams(
            dimension_semantics=("parallel", "parallel", "arbitrary")),
        cost_estimate=pl.CostEstimate(flops=flops, transcendentals=0,
                                      bytes_accessed=bytes_accessed),
    )(*args)
    return out[:M, :N]


# ----------------------------------------------------------------------------
# Bottleneck wrapper: conv lowering (1x1 -> matmul, 3x3 -> im2col matmul)
# ----------------------------------------------------------------------------
def _im2col_3x3(x_nhwc, stride):
    """3x3 / pad=1 / given stride -> (N*Ho*Wo, 9*C) patches (kh-major, kw, C order)."""
    N, H, W, C = x_nhwc.shape
    Ho = (H + 2 - 3) // stride + 1
    Wo = (W + 2 - 3) // stride + 1
    xp = jnp.pad(x_nhwc, ((0, 0), (1, 1), (1, 1), (0, 0)))
    cols = []
    for dy in range(3):
        for dx in range(3):
            cols.append(xp[:, dy:dy + stride * (Ho - 1) + 1:stride,
                            dx:dx + stride * (Wo - 1) + 1:stride, :])
    patches = jnp.concatenate(cols, axis=-1)            # (N, Ho, Wo, 9*C)
    return patches.reshape(N * Ho * Wo, 9 * C), Ho, Wo


def _fold_bn(gamma, beta, rmean, rvar, eps=EPS):
    scale = gamma / jnp.sqrt(rvar + eps)
    shift = beta - rmean * scale
    return scale.astype(jnp.float32), shift.astype(jnp.float32)


def prepare_bottleneck_params(p):
    """One-time prep (outside the hot path): conv weights -> (K, N) matmul layout,
    eval-mode BN folded into per-output-channel (scale, shift). Convs are bias-free
    (standard ResNet)."""
    cmid, cin = p["conv1_w"].shape[:2]
    cout = p["conv2_w"].shape[0]
    prep = {}
    prep["w1"] = p["conv1_w"].reshape(cmid, cin).T                        # (Cin, Cmid)
    prep["scale1"], prep["shift1"] = _fold_bn(p["bn1_gamma"], p["bn1_beta"],
                                              p["bn1_mean"], p["bn1_var"])
    prep["w2"] = jnp.transpose(p["conv2_w"], (2, 3, 1, 0)).reshape(9 * cmid, cout)
    prep["scale2"], prep["shift2"] = _fold_bn(p["bn2_gamma"], p["bn2_beta"],
                                              p["bn2_mean"], p["bn2_var"])
    if p.get("ds_conv_w") is not None:
        prep["w_ds"] = p["ds_conv_w"].reshape(cout, cin).T                # (Cin, Cout)
        prep["scale_ds"], prep["shift_ds"] = _fold_bn(p["ds_bn_gamma"], p["ds_bn_beta"],
                                                      p["ds_bn_mean"], p["ds_bn_var"])
    else:
        prep["w_ds"] = None
    return prep


def bottleneck_forward(x_nchw, prep, stride):
    """Pallas implementation of Bottleneck.forward (eval-mode BN)."""
    N, Cin, H, W = x_nchw.shape
    x_nhwc = jnp.transpose(x_nchw, (0, 2, 3, 1))
    Cmid = prep["w1"].shape[1]
    Cout = prep["w2"].shape[1]

    # conv1 (1x1) + bn1 + relu
    out1 = fused_matmul_bn(x_nhwc.reshape(N * H * W, Cin),
                           prep["w1"], prep["scale1"], prep["shift1"],
                           relu_out=True)
    out1 = out1.reshape(N, H, W, Cmid)

    # downsample branch: 1x1 conv (stride) + bn, no relu
    residual = None
    if prep["w_ds"] is not None:
        x_ds = x_nhwc[:, ::stride, ::stride, :]
        Nd, Hd, Wd, _ = x_ds.shape
        residual = fused_matmul_bn(x_ds.reshape(Nd * Hd * Wd, Cin),
                                   prep["w_ds"], prep["scale_ds"], prep["shift_ds"],
                                   relu_out=False)

    # conv2 (3x3, stride, pad 1) + bn2 + relu (+ residual add + relu) — one kernel
    patches, Ho, Wo = _im2col_3x3(out1, stride)
    out = fused_matmul_bn(patches, prep["w2"], prep["scale2"], prep["shift2"],
                          residual=residual, relu_out=True)
    out = out.reshape(N, Ho, Wo, Cout)
    return jnp.transpose(out, (0, 3, 1, 2))              # back to NCHW


# ----------------------------------------------------------------------------
# Pure-JAX reference (same bf16-operand / f32-accumulation numerics)
# ----------------------------------------------------------------------------
def _bn_ref(x_nchw, gamma, beta, rmean, rvar, eps=EPS):
    g = gamma.reshape(1, -1, 1, 1)
    b = beta.reshape(1, -1, 1, 1)
    m = rmean.reshape(1, -1, 1, 1)
    v = rvar.reshape(1, -1, 1, 1)
    return (x_nchw - m) / jnp.sqrt(v + eps) * g + b


def _conv_ref(x, w, stride, padding):
    return jax.lax.conv_general_dilated(
        x.astype(jnp.bfloat16), w.astype(jnp.bfloat16),
        window_strides=(stride, stride), padding=padding,
        dimension_numbers=("NCHW", "OIHW", "NCHW"),
        preferred_element_type=jnp.float32)


def bottleneck_ref(x, p, stride):
    relu = lambda t: jnp.maximum(t, 0.0)
    out = _conv_ref(x, p["conv1_w"], 1, "VALID")
    out = relu(_bn_ref(out, p["bn1_gamma"], p["bn1_beta"], p["bn1_mean"], p["bn1_var"]))
    out = _conv_ref(out, p["conv2_w"], stride, ((1, 1), (1, 1)))
    out = relu(_bn_ref(out, p["bn2_gamma"], p["bn2_beta"], p["bn2_mean"], p["bn2_var"]))
    if p.get("ds_conv_w") is not None:
        res = _conv_ref(x, p["ds_conv_w"], stride, "VALID")
        res = _bn_ref(res, p["ds_bn_gamma"], p["ds_bn_beta"],
                      p["ds_bn_mean"], p["ds_bn_var"])
        out = out + res
    return relu(out)


if __name__ == "__main__":
    key = jax.random.PRNGKey(0)
    ks = jax.random.split(key, 8)

    batch, cin, h, w_sp = 2, 16, 16, 16
    cmid, cout, stride = 16, 64, 2          # expansion=4 -> cout = 4 * cmid

    x = jax.random.normal(ks[0], (batch, cin, h, w_sp), dtype=jnp.float32)

    def bn_params(k, c):
        k1, k2, k3, k4 = jax.random.split(k, 4)
        return (1.0 + 0.1 * jax.random.normal(k1, (c,)),   # gamma
                0.1 * jax.random.normal(k2, (c,)),          # beta
                0.1 * jax.random.normal(k3, (c,)),          # running_mean
                1.0 + 0.1 * jax.random.uniform(k4, (c,)))   # running_var > 0

    p = {}
    p["conv1_w"] = 0.2 * jax.random.normal(ks[1], (cmid, cin, 1, 1), dtype=jnp.float32)
    p["bn1_gamma"], p["bn1_beta"], p["bn1_mean"], p["bn1_var"] = bn_params(ks[2], cmid)
    p["conv2_w"] = 0.1 * jax.random.normal(ks[3], (cout, cmid, 3, 3), dtype=jnp.float32)
    p["bn2_gamma"], p["bn2_beta"], p["bn2_mean"], p["bn2_var"] = bn_params(ks[4], cout)
    p["ds_conv_w"] = 0.2 * jax.random.normal(ks[5], (cout, cin, 1, 1), dtype=jnp.float32)
    p["ds_bn_gamma"], p["ds_bn_beta"], p["ds_bn_mean"], p["ds_bn_var"] = bn_params(ks[6], cout)

    # --- with downsample (residual branch) -----------------------------------
    prep = prepare_bottleneck_params(p)
    fwd = jax.jit(functools.partial(bottleneck_forward, prep=prep, stride=stride))
    out = jax.block_until_ready(fwd(x))
    ref = jax.block_until_ready(bottleneck_ref(x, p, stride))
    assert out.shape == ref.shape, (out.shape, ref.shape)
    assert jnp.allclose(out, ref, atol=1e-2, rtol=1e-2), \
        float(jnp.max(jnp.abs(out - ref)))

    # --- without downsample (no residual, stride 1) ---------------------------
    p_nd = dict(p)
    p_nd["ds_conv_w"] = None
    prep_nd = prepare_bottleneck_params(p_nd)
    fwd_nd = jax.jit(functools.partial(bottleneck_forward, prep=prep_nd, stride=1))
    out_nd = jax.block_until_ready(fwd_nd(x))
    ref_nd = bottleneck_ref(x, p_nd, 1)
    assert jnp.allclose(out_nd, ref_nd, atol=1e-2, rtol=1e-2), \
        float(jnp.max(jnp.abs(out_nd - ref_nd)))

    print("KERNEL_OK")
</pallas_src>

<mosaic_0001>
module attributes {stable_mosaic.version = 11 : i64} {
  func.func @kernel(%arg0: i32, %arg1: i32, %arg2: i32, %arg3: memref<128x128xbf16, #tpu.memory_space<vmem>>, %arg4: memref<128x128xbf16, #tpu.memory_space<vmem>>, %arg5: memref<1x128xf32, #tpu.memory_space<vmem>>, %arg6: memref<1x128xf32, #tpu.memory_space<vmem>>, %arg7: memref<128x128xf32, #tpu.memory_space<vmem>>, %arg8: memref<128x128xf32, #tpu.memory_space<vmem>>) attributes {dimension_semantics = [#tpu.dimension_semantics<parallel>, #tpu.dimension_semantics<parallel>, #tpu.dimension_semantics<arbitrary>], iteration_bounds = array<i64: 1, 1, 1>, scalar_prefetch = 0 : i64, scratch_operands = 1 : i64, tpu.core_type = #tpu.core_type<tc>, window_params = [{transform_indices = @transform_0, window_bounds = array<i64: 128, 128>}, {transform_indices = @transform_1, window_bounds = array<i64: 128, 128>}, {transform_indices = @transform_2, window_bounds = array<i64: 1, 128>}, {transform_indices = @transform_3, window_bounds = array<i64: 1, 128>}, {transform_indices = @transform_4, window_bounds = array<i64: 128, 128>}]} {
    %c0_i32 = arith.constant 0 : i32
    %0 = arith.cmpi eq, %arg2, %c0_i32 : i32
    %1 = arith.extui %0 : i1 to i32
    %c0_i32_0 = arith.constant 0 : i32
    %2 = arith.cmpi ne, %1, %c0_i32_0 : i32
    scf.if %2 {
      %cst_10 = arith.constant 0.000000e+00 : f32
      %12 = vector.broadcast %cst_10 : f32 to vector<128x128xf32>
      %c0_11 = arith.constant 0 : index
      %c0_12 = arith.constant 0 : index
      %13 = vector.load %arg8[%c0_11, %c0_12] : memref<128x128xf32, #tpu.memory_space<vmem>>, vector<128x128xf32>
      tpu.vector_store %arg8[%c0_11, %c0_12], %12 {strides = array<i32>} : memref<128x128xf32, #tpu.memory_space<vmem>>, vector<128x128xf32>,
    } else {
    }
    %c0 = arith.constant 0 : index
    %c0_1 = arith.constant 0 : index
    %3 = vector.load %arg8[%c0, %c0_1] : memref<128x128xf32, #tpu.memory_space<vmem>>, vector<128x128xf32>
    %c0_2 = arith.constant 0 : index
    %c0_3 = arith.constant 0 : index
    %4 = vector.load %arg3[%c0_2, %c0_3] : memref<128x128xbf16, #tpu.memory_space<vmem>>, vector<128x128xbf16>
    %c0_4 = arith.constant 0 : index
    %c0_5 = arith.constant 0 : index
    %5 = vector.load %arg4[%c0_4, %c0_5] : memref<128x128xbf16, #tpu.memory_space<vmem>>, vector<128x128xbf16>
    %cst = arith.constant dense<0.000000e+00> : vector<128x128xf32>
    %6 = tpu.matmul %4, %5, %cst {dimension_numbers = #tpu.dot_dimension_numbers<[1], [0], [0], [1], [0, 0, 1, 1], [], []>} : vector<128x128xbf16>, vector<128x128xbf16>, vector<128x128xf32> -> vector<128x128xf32>
    %7 = arith.addf %3, %6 : vector<128x128xf32>
    %c0_6 = arith.constant 0 : index
    %c0_7 = arith.constant 0 : index
    %8 = vector.load %arg8[%c0_6, %c0_7] : memref<128x128xf32, #tpu.memory_space<vmem>>, vector<128x128xf32>
    tpu.vector_store %arg8[%c0_6, %c0_7], %7 {strides = array<i32>} : memref<128x128xf32, #tpu.memory_space<vmem>>, vector<128x128xf32>,
    %c0_i32_8 = arith.constant 0 : i32
    %9 = arith.cmpi eq, %arg2, %c0_i32_8 : i32
    %10 = arith.extui %9 : i1 to i32
    %c0_i32_9 = arith.constant 0 : i32
    %11 = arith.cmpi ne, %10, %c0_i32_9 : i32
    scf.if %11 {
      %c0_10 = arith.constant 0 : index
      %c0_11 = arith.constant 0 : index
      %12 = vector.load %arg8[%c0_10, %c0_11] : memref<128x128xf32, #tpu.memory_space<vmem>>, vector<128x128xf32>
      %c0_12 = arith.constant 0 : index
      %c0_13 = arith.constant 0 : index
      %13 = vector.load %arg5[%c0_12, %c0_13] : memref<1x128xf32, #tpu.memory_space<vmem>>, vector<1x128xf32>
      %14 = vector.broadcast %13 : vector<1x128xf32> to vector<128x128xf32>
      %15 = arith.mulf %12, %14 : vector<128x128xf32>
      %c0_14 = arith.constant 0 : index
      %c0_15 = arith.constant 0 : index
      %16 = vector.load %arg6[%c0_14, %c0_15] : memref<1x128xf32, #tpu.memory_space<vmem>>, vector<1x128xf32>
      %17 = vector.broadcast %16 : vector<1x128xf32> to vector<128x128xf32>
      %18 = arith.addf %15, %17 : vector<128x128xf32>
      %c0_16 = arith.constant 0 : index
      %c0_17 = arith.constant 0 : index
      %19 = vector.load %arg7[%c0_16, %c0_17] : memref<128x128xf32, #tpu.memory_space<vmem>>, vector<128x128xf32>
      tpu.vector_store %arg7[%c0_16, %c0_17], %18 {strides = array<i32>} : memref<128x128xf32, #tpu.memory_space<vmem>>, vector<128x128xf32>,
    } else {
    }
    return
  }
  func.func @transform_0(%arg0: i32, %arg1: i32, %arg2: i32) -> (i32, i32) {
    %c0_i32 = arith.constant 0 : i32
    return %arg0, %arg2 : i32, i32
  }
  func.func @transform_1(%arg0: i32, %arg1: i32, %arg2: i32) -> (i32, i32) {
    %c0_i32 = arith.constant 0 : i32
    return %arg2, %arg1 : i32, i32
  }
  func.func @transform_2(%arg0: i32, %arg1: i32, %arg2: i32) -> (i32, i32) {
    %c0_i32 = arith.constant 0 : i32
    %c0_i32_0 = arith.constant 0 : i32
    return %c0_i32, %arg1 : i32, i32
  }
  func.func @transform_3(%arg0: i32, %arg1: i32, %arg2: i32) -> (i32, i32) {
    %c0_i32 = arith.constant 0 : i32
    %c0_i32_0 = arith.constant 0 : i32
    return %c0_i32, %arg1 : i32, i32
  }
  func.func @transform_4(%arg0: i32, %arg1: i32, %arg2: i32) -> (i32, i32) {
    %c0_i32 = arith.constant 0 : i32
    return %arg0, %arg1 : i32, i32
  }
}

module attributes {stable_mosaic.version = 11 : i64} {
  func.func @kernel(%arg0: i32, %arg1: i32, %arg2: i32, %arg3: memref<256x128xbf16, #tpu.memory_space<vmem>>, %arg4: memref<128x128xbf16, #tpu.memory_space<vmem>>, %arg5: memref<1x128xf32, #tpu.memory_space<vmem>>, %arg6: memref<1x128xf32, #tpu.memory_space<vmem>>, %arg7: memref<256x128xf32, #tpu.memory_space<vmem>>, %arg8: memref<256x128xf32, #tpu.memory_space<vmem>>) attributes {dimension_semantics = [#tpu.dimension_semantics<parallel>, #tpu.dimension_semantics<parallel>, #tpu.dimension_semantics<arbitrary>], iteration_bounds = array<i64: 2, 1, 1>, scalar_prefetch = 0 : i64, scratch_operands = 1 : i64, tpu.core_type = #tpu.core_type<tc>, window_params = [{transform_indices = @transform_0, window_bounds = array<i64: 256, 128>}, {transform_indices = @transform_1, window_bounds = array<i64: 128, 128>}, {transform_indices = @transform_2, window_bounds = array<i64: 1, 128>}, {transform_indices = @transform_3, window_bounds = array<i64: 1, 128>}, {transform_indices = @transform_4, window_bounds = array<i64: 256, 128>}]} {
    %c0_i32 = arith.constant 0 : i32
    %0 = arith.cmpi eq, %arg2, %c0_i32 : i32
    %1 = arith.extui %0 : i1 to i32
    %c0_i32_0 = arith.constant 0 : i32
    %2 = arith.cmpi ne, %1, %c0_i32_0 : i32
    scf.if %2 {
      %cst_10 = arith.constant 0.000000e+00 : f32
      %12 = vector.broadcast %cst_10 : f32 to vector<256x128xf32>
      %c0_11 = arith.constant 0 : index
      %c0_12 = arith.constant 0 : index
      %13 = vector.load %arg8[%c0_11, %c0_12] : memref<256x128xf32, #tpu.memory_space<vmem>>, vector<256x128xf32>
      tpu.vector_store %arg8[%c0_11, %c0_12], %12 {strides = array<i32>} : memref<256x128xf32, #tpu.memory_space<vmem>>, vector<256x128xf32>,
    } else {
    }
    %c0 = arith.constant 0 : index
    %c0_1 = arith.constant 0 : index
    %3 = vector.load %arg8[%c0, %c0_1] : memref<256x128xf32, #tpu.memory_space<vmem>>, vector<256x128xf32>
    %c0_2 = arith.constant 0 : index
    %c0_3 = arith.constant 0 : index
    %4 = vector.load %arg3[%c0_2, %c0_3] : memref<256x128xbf16, #tpu.memory_space<vmem>>, vector<256x128xbf16>
    %c0_4 = arith.constant 0 : index
    %c0_5 = arith.constant 0 : index
    %5 = vector.load %arg4[%c0_4, %c0_5] : memref<128x128xbf16, #tpu.memory_space<vmem>>, vector<128x128xbf16>
    %cst = arith.constant dense<0.000000e+00> : vector<256x128xf32>
    %6 = tpu.matmul %4, %5, %cst {dimension_numbers = #tpu.dot_dimension_numbers<[1], [0], [0], [1], [0, 0, 1, 1], [], []>} : vector<256x128xbf16>, vector<128x128xbf16>, vector<256x128xf32> -> vector<256x128xf32>
    %7 = arith.addf %3, %6 : vector<256x128xf32>
    %c0_6 = arith.constant 0 : index
    %c0_7 = arith.constant 0 : index
    %8 = vector.load %arg8[%c0_6, %c0_7] : memref<256x128xf32, #tpu.memory_space<vmem>>, vector<256x128xf32>
    tpu.vector_store %arg8[%c0_6, %c0_7], %7 {strides = array<i32>} : memref<256x128xf32, #tpu.memory_space<vmem>>, vector<256x128xf32>,
    %c0_i32_8 = arith.constant 0 : i32
    %9 = arith.cmpi eq, %arg2, %c0_i32_8 : i32
    %10 = arith.extui %9 : i1 to i32
    %c0_i32_9 = arith.constant 0 : i32
    %11 = arith.cmpi ne, %10, %c0_i32_9 : i32
    scf.if %11 {
      %c0_10 = arith.constant 0 : index
      %c0_11 = arith.constant 0 : index
      %12 = vector.load %arg8[%c0_10, %c0_11] : memref<256x128xf32, #tpu.memory_space<vmem>>, vector<256x128xf32>
      %c0_12 = arith.constant 0 : index
      %c0_13 = arith.constant 0 : index
      %13 = vector.load %arg5[%c0_12, %c0_13] : memref<1x128xf32, #tpu.memory_space<vmem>>, vector<1x128xf32>
      %14 = vector.broadcast %13 : vector<1x128xf32> to vector<256x128xf32>
      %15 = arith.mulf %12, %14 : vector<256x128xf32>
      %c0_14 = arith.constant 0 : index
      %c0_15 = arith.constant 0 : index
      %16 = vector.load %arg6[%c0_14, %c0_15] : memref<1x128xf32, #tpu.memory_space<vmem>>, vector<1x128xf32>
      %17 = vector.broadcast %16 : vector<1x128xf32> to vector<256x128xf32>
      %18 = arith.addf %15, %17 : vector<256x128xf32>
      %cst_16 = arith.constant 0.000000e+00 : f32
      %19 = vector.broadcast %cst_16 : f32 to vector<256x128xf32>
      %20 = arith.maximumf %18, %19 : vector<256x128xf32>
      %c0_17 = arith.constant 0 : index
      %c0_18 = arith.constant 0 : index
      %21 = vector.load %arg7[%c0_17, %c0_18] : memref<256x128xf32, #tpu.memory_space<vmem>>, vector<256x128xf32>
      tpu.vector_store %arg7[%c0_17, %c0_18], %20 {strides = array<i32>} : memref<256x128xf32, #tpu.memory_space<vmem>>, vector<256x128xf32>,
    } else {
    }
    return
  }
  func.func @transform_0(%arg0: i32, %arg1: i32, %arg2: i32) -> (i32, i32) {
    %c0_i32 = arith.constant 0 : i32
    return %arg0, %arg2 : i32, i32
  }
  func.func @transform_1(%arg0: i32, %arg1: i32, %arg2: i32) -> (i32, i32) {
    %c0_i32 = arith.constant 0 : i32
    return %arg2, %arg1 : i32, i32
  }
  func.func @transform_2(%arg0: i32, %arg1: i32, %arg2: i32) -> (i32, i32) {
    %c0_i32 = arith.constant 0 : i32
    %c0_i32_0 = arith.constant 0 : i32
    return %c0_i32, %arg1 : i32, i32
  }
  func.func @transform_3(%arg0: i32, %arg1: i32, %arg2: i32) -> (i32, i32) {
    %c0_i32 = arith.constant 0 : i32
    %c0_i32_0 = arith.constant 0 : i32
    return %c0_i32, %arg1 : i32, i32
  }
  func.func @transform_4(%arg0: i32, %arg1: i32, %arg2: i32) -> (i32, i32) {
    %c0_i32 = arith.constant 0 : i32
    return %arg0, %arg1 : i32, i32
  }
}

module attributes {stable_mosaic.version = 11 : i64} {
  func.func @kernel(%arg0: i32, %arg1: i32, %arg2: i32, %arg3: memref<128x128xbf16, #tpu.memory_space<vmem>>, %arg4: memref<128x128xbf16, #tpu.memory_space<vmem>>, %arg5: memref<1x128xf32, #tpu.memory_space<vmem>>, %arg6: memref<1x128xf32, #tpu.memory_space<vmem>>, %arg7: memref<128x128xf32, #tpu.memory_space<vmem>>, %arg8: memref<128x128xf32, #tpu.memory_space<vmem>>, %arg9: memref<128x128xf32, #tpu.memory_space<vmem>>) attributes {dimension_semantics = [#tpu.dimension_semantics<parallel>, #tpu.dimension_semantics<parallel>, #tpu.dimension_semantics<arbitrary>], iteration_bounds = array<i64: 1, 1, 2>, scalar_prefetch = 0 : i64, scratch_operands = 1 : i64, tpu.core_type = #tpu.core_type<tc>, window_params = [{transform_indices = @transform_0, window_bounds = array<i64: 128, 128>}, {transform_indices = @transform_1, window_bounds = array<i64: 128, 128>}, {transform_indices = @transform_2, window_bounds = array<i64: 1, 128>}, {transform_indices = @transform_3, window_bounds = array<i64: 1, 128>}, {transform_indices = @transform_4, window_bounds = array<i64: 128, 128>}, {transform_indices = @transform_5, window_bounds = array<i64: 128, 128>}]} {
    %c0_i32 = arith.constant 0 : i32
    %0 = arith.cmpi eq, %arg2, %c0_i32 : i32
    %1 = arith.extui %0 : i1 to i32
    %c0_i32_0 = arith.constant 0 : i32
    %2 = arith.cmpi ne, %1, %c0_i32_0 : i32
    scf.if %2 {
      %cst_9 = arith.constant 0.000000e+00 : f32
      %12 = vector.broadcast %cst_9 : f32 to vector<128x128xf32>
      %c0_10 = arith.constant 0 : index
      %c0_11 = arith.constant 0 : index
      %13 = vector.load %arg9[%c0_10, %c0_11] : memref<128x128xf32, #tpu.memory_space<vmem>>, vector<128x128xf32>
      tpu.vector_store %arg9[%c0_10, %c0_11], %12 {strides = array<i32>} : memref<128x128xf32, #tpu.memory_space<vmem>>, vector<128x128xf32>,
    } else {
    }
    %c0 = arith.constant 0 : index
    %c0_1 = arith.constant 0 : index
    %3 = vector.load %arg9[%c0, %c0_1] : memref<128x128xf32, #tpu.memory_space<vmem>>, vector<128x128xf32>
    %c0_2 = arith.constant 0 : index
    %c0_3 = arith.constant 0 : index
    %4 = vector.load %arg3[%c0_2, %c0_3] : memref<128x128xbf16, #tpu.memory_space<vmem>>, vector<128x128xbf16>
    %c0_4 = arith.constant 0 : index
    %c0_5 = arith.constant 0 : index
    %5 = vector.load %arg4[%c0_4, %c0_5] : memref<128x128xbf16, #tpu.memory_space<vmem>>, vector<128x128xbf16>
    %cst = arith.constant dense<0.000000e+00> : vector<128x128xf32>
    %6 = tpu.matmul %4, %5, %cst {dimension_numbers = #tpu.dot_dimension_numbers<[1], [0], [0], [1], [0, 0, 1, 1], [], []>} : vector<128x128xbf16>, vector<128x128xbf16>, vector<128x128xf32> -> vector<128x128xf32>
    %7 = arith.addf %3, %6 : vector<128x128xf32>
    %c0_6 = arith.constant 0 : index
    %c0_7 = arith.constant 0 : index
    %8 = vector.load %arg9[%c0_6, %c0_7] : memref<128x128xf32, #tpu.memory_space<vmem>>, vector<128x128xf32>
    tpu.vector_store %arg9[%c0_6, %c0_7], %7 {strides = array<i32>} : memref<128x128xf32, #tpu.memory_space<vmem>>, vector<128x128xf32>,
    %c1_i32 = arith.constant 1 : i32
    %9 = arith.cmpi eq, %arg2, %c1_i32 : i32
    %10 = arith.extui %9 : i1 to i32
    %c0_i32_8 = arith.constant 0 : i32
    %11 = arith.cmpi ne, %10, %c0_i32_8 : i32
    scf.if %11 {
      %c0_9 = arith.constant 0 : index
      %c0_10 = arith.constant 0 : index
      %12 = vector.load %arg9[%c0_9, %c0_10] : memref<128x128xf32, #tpu.memory_space<vmem>>, vector<128x128xf32>
      %c0_11 = arith.constant 0 : index
      %c0_12 = arith.constant 0 : index
      %13 = vector.load %arg5[%c0_11, %c0_12] : memref<1x128xf32, #tpu.memory_space<vmem>>, vector<1x128xf32>
      %14 = vector.broadcast %13 : vector<1x128xf32> to vector<128x128xf32>
      %15 = arith.mulf %12, %14 : vector<128x128xf32>
      %c0_13 = arith.constant 0 : index
      %c0_14 = arith.constant 0 : index
      %16 = vector.load %arg6[%c0_13, %c0_14] : memref<1x128xf32, #tpu.memory_space<vmem>>, vector<1x128xf32>
      %17 = vector.broadcast %16 : vector<1x128xf32> to vector<128x128xf32>
      %18 = arith.addf %15, %17 : vector<128x128xf32>
      %cst_15 = arith.constant 0.000000e+00 : f32
      %19 = vector.broadcast %cst_15 : f32 to vector<128x128xf32>
      %20 = arith.maximumf %18, %19 : vector<128x128xf32>
      %c0_16 = arith.constant 0 : index
      %c0_17 = arith.constant 0 : index
      %21 = vector.load %arg7[%c0_16, %c0_17] : memref<128x128xf32, #tpu.memory_space<vmem>>, vector<128x128xf32>
      %22 = arith.addf %20, %21 : vector<128x128xf32>
      %cst_18 = arith.constant 0.000000e+00 : f32
      %23 = vector.broadcast %cst_18 : f32 to vector<128x128xf32>
      %24 = arith.maximumf %22, %23 : vector<128x128xf32>
      %c0_19 = arith.constant 0 : index
      %c0_20 = arith.constant 0 : index
      %25 = vector.load %arg8[%c0_19, %c0_20] : memref<128x128xf32, #tpu.memory_space<vmem>>, vector<128x128xf32>
      tpu.vector_store %arg8[%c0_19, %c0_20], %24 {strides = array<i32>} : memref<128x128xf32, #tpu.memory_space<vmem>>, vector<128x128xf32>,
    } else {
    }
    return
  }
  func.func @transform_0(%arg0: i32, %arg1: i32, %arg2: i32) -> (i32, i32) {
    %c0_i32 = arith.constant 0 : i32
    return %arg0, %arg2 : i32, i32
  }
  func.func @transform_1(%arg0: i32, %arg1: i32, %arg2: i32) -> (i32, i32) {
    %c0_i32 = arith.constant 0 : i32
    return %arg2, %arg1 : i32, i32
  }
  func.func @transform_2(%arg0: i32, %arg1: i32, %arg2: i32) -> (i32, i32) {
    %c0_i32 = arith.constant 0 : i32
    %c0_i32_0 = arith.constant 0 : i32
    return %c0_i32, %arg1 : i32, i32
  }
  func.func @transform_3(%arg0: i32, %arg1: i32, %arg2: i32) -> (i32, i32) {
    %c0_i32 = arith.constant 0 : i32
    %c0_i32_0 = arith.constant 0 : i32
    return %c0_i32, %arg1 : i32, i32
  }
  func.func @transform_4(%arg0: i32, %arg1: i32, %arg2: i32) -> (i32, i32) {
    %c0_i32 = arith.constant 0 : i32
    return %arg0, %arg1 : i32, i32
  }
  func.func @transform_5(%arg0: i32, %arg1: i32, %arg2: i32) -> (i32, i32) {
    %c0_i32 = arith.constant 0 : i32
    return %arg0, %arg1 : i32, i32
  }
}

</mosaic_0001>

<llo_original>
// kernel: bottleneck_forward.4
$region0: #{bottleneck_forward.4}
  #allocation0 [shape = 'u32[]', space=smem, size = 0x4, offset = 0x4, fixed_abs, tag = 'smem constant byte address 0x4 - core index']
  #allocation1 [shape = 'u32[144,128]{1,0:T(1,128)}', space=vmem, size = 0x12000, scoped, tag = 'internal scratch']
  #allocation2 [shape = 'f32[128,128]{1,0:T(8,128)}', space=vmem, size = 0x10000, scoped, tag = 'scratch operand']
  %s0 = inlined_call_operand.vmem [shape: bf16[128,128], index: 0, kind: input, shape index: {}]
  %s1 = inlined_call_operand.vmem [shape: bf16[128,128], index: 1, kind: input, shape index: {}]
  %s2 = inlined_call_operand.vmem [shape: f32[1,128], index: 2, kind: input, shape index: {}]
  %s3 = inlined_call_operand.vmem [shape: f32[1,128], index: 3, kind: input, shape index: {}]
  %s4 = inlined_call_operand.vmem [shape: f32[128,128], index: 4, kind: output, shape index: {}]
  %s5 = sld [smem:[#allocation0]]
  $region34: #{bottleneck_forward.4} parent=0
    _
  %s7 = ssub.s32 1, %s5
  %s8 = scalar_select 0, %s7, %s5
  // Predicated region
  $region2: #{bottleneck_forward.4} parent=0 // pred_check
    _
  $region3: #{bottleneck_forward.4} parent=0 // pred_check_branch
    %10 = sbr.rel (0) target = $region5
  $region4: #{bottleneck_forward.4} parent=0 // pred_region
    _
  $region5: #{bottleneck_forward.4} parent=0 // pred_fallthru
    _
  // Predicated region
  $region6: #{bottleneck_forward.4} parent=0 // pred_check
    _
  $region7: #{bottleneck_forward.4} parent=0 // pred_check_branch
    %12 = sbr.rel (0) target = $region9
  $region8: #{bottleneck_forward.4} parent=0 // pred_region
    _
  $region9: #{bottleneck_forward.4} parent=0 // pred_fallthru
    _
  // Predicated region
  $region10: #{bottleneck_forward.4} parent=0 // pred_check
    _
  $region11: #{bottleneck_forward.4} parent=0 // pred_check_branch
    %14 = sbr.rel (0) target = $region13
  $region12: #{bottleneck_forward.4} parent=0 // pred_region
    _
  $region13: #{bottleneck_forward.4} parent=0 // pred_fallthru
    _
  // Predicated region
  $region14: #{bottleneck_forward.4} parent=0 // pred_check
    _
  $region15: #{bottleneck_forward.4} parent=0 // pred_check_branch
    %16 = sbr.rel (0) target = $region17
  $region16: #{bottleneck_forward.4} parent=0 // pred_region
    _
  $region17: #{bottleneck_forward.4} parent=0 // pred_fallthru
    _
  %p18 = scmp.eq.s32.totalorder 0, 0
  // Predicated region
  $region18: #{bottleneck_forward.4} parent=0 // pred_check
    %p19 = pneg %p18
  $region19: #{bottleneck_forward.4} parent=0 // pred_check_branch
    %21 = sbr.rel (%p19) target = $region21
  $region20: #{bottleneck_forward.4} parent=0 // pred_region
    %22 = vst [vmem:[#allocation2] sm:$0xff] 0.0
    %23 = vst [vmem:[#allocation2 + $0x8] sm:$0xff] 0.0
    %24 = vst [vmem:[#allocation2 + $0x10] sm:$0xff] 0.0
    %25 = vst [vmem:[#allocation2 + $0x18] sm:$0xff] 0.0
    %26 = vst [vmem:[#allocation2 + $0x20] sm:$0xff] 0.0
    %27 = vst [vmem:[#allocation2 + $0x28] sm:$0xff] 0.0
    %28 = vst [vmem:[#allocation2 + $0x30] sm:$0xff] 0.0
    %29 = vst [vmem:[#allocation2 + $0x38] sm:$0xff] 0.0
    %30 = vst [vmem:[#allocation2 + $0x40] sm:$0xff] 0.0
    %31 = vst [vmem:[#allocation2 + $0x48] sm:$0xff] 0.0
    %32 = vst [vmem:[#allocation2 + $0x50] sm:$0xff] 0.0
    %33 = vst [vmem:[#allocation2 + $0x58] sm:$0xff] 0.0
    %34 = vst [vmem:[#allocation2 + $0x60] sm:$0xff] 0.0
    %35 = vst [vmem:[#allocation2 + $0x68] sm:$0xff] 0.0
    %36 = vst [vmem:[#allocation2 + $0x70] sm:$0xff] 0.0
    %37 = vst [vmem:[#allocation2 + $0x78] sm:$0xff] 0.0
  $region21: #{bottleneck_forward.4} parent=0 // pred_fallthru
    _
  %v38 = vld [vmem:[#allocation2] sm:$0xff]
  %v39 = vld [vmem:[#allocation2 + $0x8] sm:$0xff]
  %v40 = vld [vmem:[#allocation2 + $0x10] sm:$0xff]
  %v41 = vld [vmem:[#allocation2 + $0x18] sm:$0xff]
  %v42 = vld [vmem:[#allocation2 + $0x20] sm:$0xff]
  %v43 = vld [vmem:[#allocation2 + $0x28] sm:$0xff]
  %v44 = vld [vmem:[#allocation2 + $0x30] sm:$0xff]
  %v45 = vld [vmem:[#allocation2 + $0x38] sm:$0xff]
  %v46 = vld [vmem:[#allocation2 + $0x40] sm:$0xff]
  %v47 = vld [vmem:[#allocation2 + $0x48] sm:$0xff]
  %v48 = vld [vmem:[#allocation2 + $0x50] sm:$0xff]
  %v49 = vld [vmem:[#allocation2 + $0x58] sm:$0xff]
  %v50 = vld [vmem:[#allocation2 + $0x60] sm:$0xff]
  %v51 = vld [vmem:[#allocation2 + $0x68] sm:$0xff]
  %v52 = vld [vmem:[#allocation2 + $0x70] sm:$0xff]
  %v53 = vld [vmem:[#allocation2 + $0x78] sm:$0xff]
  %v54 = vld [vmem:[%s0] sm:$0xf]
  %v55 = vld [vmem:[%s0 + $0x4] sm:$0xf]
  %v56 = vld [vmem:[%s0 + $0x8] sm:$0xf]
  %v57 = vld [vmem:[%s0 + $0xc] sm:$0xf]
  %v58 = vld [vmem:[%s0 + $0x10] sm:$0xf]
  %v59 = vld [vmem:[%s0 + $0x14] sm:$0xf]
  %v60 = vld [vmem:[%s0 + $0x18] sm:$0xf]
  %v61 = vld [vmem:[%s0 + $0x1c] sm:$0xf]
  %v62 = vld [vmem:[%s0 + $0x20] sm:$0xf]
  %v63 = vld [vmem:[%s0 + $0x24] sm:$0xf]
  %v64 = vld [vmem:[%s0 + $0x28] sm:$0xf]
  %v65 = vld [vmem:[%s0 + $0x2c] sm:$0xf]
  %v66 = vld [vmem:[%s0 + $0x30] sm:$0xf]
  %v67 = vld [vmem:[%s0 + $0x34] sm:$0xf]
  %v68 = vld [vmem:[%s0 + $0x38] sm:$0xf]
  %v69 = vld [vmem:[%s0 + $0x3c] sm:$0xf]
  %v70 = vld [vmem:[%s1] sm:$0xf]
  %v71 = vld [vmem:[%s1 + $0x4] sm:$0xf]
  %v72 = vld [vmem:[%s1 + $0x8] sm:$0xf]
  %v73 = vld [vmem:[%s1 + $0xc] sm:$0xf]
  %v74 = vld [vmem:[%s1 + $0x10] sm:$0xf]
  %v75 = vld [vmem:[%s1 + $0x14] sm:$0xf]
  %v76 = vld [vmem:[%s1 + $0x18] sm:$0xf]
  %v77 = vld [vmem:[%s1 + $0x1c] sm:$0xf]
  %v78 = vld [vmem:[%s1 + $0x20] sm:$0xf]
  %v79 = vld [vmem:[%s1 + $0x24] sm:$0xf]
  %v80 = vld [vmem:[%s1 + $0x28] sm:$0xf]
  %v81 = vld [vmem:[%s1 + $0x2c] sm:$0xf]
  %v82 = vld [vmem:[%s1 + $0x30] sm:$0xf]
  %v83 = vld [vmem:[%s1 + $0x34] sm:$0xf]
  %v84 = vld [vmem:[%s1 + $0x38] sm:$0xf]
  %v85 = vld [vmem:[%s1 + $0x3c] sm:$0xf]
  %v102 = vunpack.c.l.b16 %v54
  %v103 = vunpack.c.l.b16 %v55
  %v104 = vunpack.c.l.b16 %v56
  %v105 = vunpack.c.l.b16 %v57
  %v106 = vunpack.c.l.b16 %v58
  %v107 = vunpack.c.l.b16 %v59
  %v108 = vunpack.c.l.b16 %v60
  %v109 = vunpack.c.l.b16 %v61
  %v110 = vunpack.c.l.b16 %v62
  %v111 = vunpack.c.l.b16 %v63
  %v112 = vunpack.c.l.b16 %v64
  %v113 = vunpack.c.l.b16 %v65
  %v114 = vunpack.c.l.b16 %v66
  %v115 = vunpack.c.l.b16 %v67
  %v116 = vunpack.c.l.b16 %v68
  %v117 = vunpack.c.l.b16 %v69
  %v118 = vpack.c.b16 %v103, %v102
  %v119 = vpack.c.b16 %v105, %v104
  %v120 = vpack.c.b16 %v107, %v106
  %v121 = vpack.c.b16 %v109, %v108
  %v122 = vpack.c.b16 %v111, %v110
  %v123 = vpack.c.b16 %v113, %v112
  %v124 = vpack.c.b16 %v115, %v114
  %v125 = vpack.c.b16 %v117, %v116
  %v150 = vunpack.c.l.b16 %v70
  %v151 = vunpack.c.l.b16 %v71
  %v152 = vunpack.c.l.b16 %v72
  %v153 = vunpack.c.l.b16 %v73
  %v154 = vunpack.c.l.b16 %v74
  %v155 = vunpack.c.l.b16 %v75
  %v156 = vunpack.c.l.b16 %v76
  %v157 = vunpack.c.l.b16 %v77
  %v158 = vunpack.c.l.b16 %v78
  %v159 = vunpack.c.l.b16 %v79
  %v160 = vunpack.c.l.b16 %v80
  %v161 = vunpack.c.l.b16 %v81
  %v162 = vunpack.c.l.b16 %v82
  %v163 = vunpack.c.l.b16 %v83
  %v164 = vunpack.c.l.b16 %v84
  %v165 = vunpack.c.l.b16 %v85
  %v166 = vpack.c.b16 %v151, %v150
  %v167 = vpack.c.b16 %v153, %v152
  %v168 = vpack.c.b16 %v155, %v154
  %v169 = vpack.c.b16 %v157, %v156
  %v170 = vpack.c.b16 %v159, %v158
  %v171 = vpack.c.b16 %v161, %v160
  %v172 = vpack.c.b16 %v163, %v162
  %v173 = vpack.c.b16 %v165, %v164
  %182 = vmatprep.subr.bf16.mxu0 0
  %183 = vmatpush1.bf16.msra.mxu0 %v173
  %184 = vmatprep.subr.bf16.mxu0 0
  %185 = vmatpush1.bf16.msra.mxu0 %v172
  %186 = vmatprep.subr.bf16.mxu0 0
  %187 = vmatpush1.bf16.msra.mxu0 %v171
  %188 = vmatprep.subr.bf16.mxu0 0
  %189 = vmatpush1.bf16.msra.mxu0 %v170
  %190 = vmatprep.subr.bf16.mxu0 0
  %191 = vmatpush1.bf16.msra.mxu0 %v169
  %192 = vmatprep.subr.bf16.mxu0 0
  %193 = vmatpush1.bf16.msra.mxu0 %v168
  %194 = vmatprep.subr.bf16.mxu0 0
  %195 = vmatpush1.bf16.msra.mxu0 %v167
  %196 = vmatprep.subr.bf16.mxu0 0
  %197 = vmatpush1.bf16.msra.mxu0 %v166
  %198 = vmatprep.subr.bf16.mxu0 0
  %199 = vmatpush2.bf16.msra.mxu0 0
  %200 = vmatprep.subr.bf16.mxu0 0
  %201 = vmatpush2.bf16.msra.mxu0 0
  %202 = vmatprep.subr.bf16.mxu0 0
  %203 = vmatpush2.bf16.msra.mxu0 0
  %204 = vmatprep.subr.bf16.mxu0 0
  %205 = vmatpush2.bf16.msra.mxu0 0
  %206 = vmatprep.subr.bf16.mxu0 0
  %207 = vmatpush2.bf16.msra.mxu0 0
  %208 = vmatprep.subr.bf16.mxu0 0
  %209 = vmatpush2.bf16.msra.mxu0 0
  %210 = vmatprep.subr.bf16.mxu0 0
  %211 = vmatpush2.bf16.msra.mxu0 0
  %212 = vmatprep.subr.bf16.mxu0 0
  %213 = vmatpush2.bf16.msra.mxu0 0
  %214 = vmatprep.mubr.bf16.mxu0 0
  %215 = vmatmul.mubr.bf16.gmra.mxu0 %v118
  %v216 = vpop.f32.mrf.mxu0
  %v217 = vadd.f32 0.0, %v216
  %v218 = vpop.f32.mrf.mxu0
  %v219 = vpop.f32.mrf.mxu0
  %v220 = vadd.f32 0.0, %v219
  %v221 = vpop.f32.mrf.mxu0
  %222 = vmatprep.mubr.bf16.mxu0 0
  %223 = vmatmul.mubr.bf16.gmra.mxu0 %v119
  %v224 = vpop.f32.mrf.mxu0
  %v225 = vadd.f32 0.0, %v224
  %v226 = vpop.f32.mrf.mxu0
  %v227 = vpop.f32.mrf.mxu0
  %v228 = vadd.f32 0.0, %v227
  %v229 = vpop.f32.mrf.mxu0
  %230 = vmatprep.mubr.bf16.mxu0 0
  %231 = vmatmul.mubr.bf16.gmra.mxu0 %v120
  %v232 = vpop.f32.mrf.mxu0
  %v233 = vadd.f32 0.0, %v232
  %v234 = vpop.f32.mrf.mxu0
  %v235 = vpop.f32.mrf.mxu0
  %v236 = vadd.f32 0.0, %v235
  %v237 = vpop.f32.mrf.mxu0
  %238 = vmatprep.mubr.bf16.mxu0 0
  %239 = vmatmul.mubr.bf16.gmra.mxu0 %v121
  %v240 = vpop.f32.mrf.mxu0
  %v241 = vadd.f32 0.0, %v240
  %v242 = vpop.f32.mrf.mxu0
  %v243 = vpop.f32.mrf.mxu0
  %v244 = vadd.f32 0.0, %v243
  %v245 = vpop.f32.mrf.mxu0
  %246 = vmatprep.mubr.bf16.mxu0 0
  %247 = vmatmul.mubr.bf16.gmra.mxu0 %v122
  %v248 = vpop.f32.mrf.mxu0
  %v249 = vadd.f32 0.0, %v248
  %v250 = vpop.f32.mrf.mxu0
  %v251 = vpop.f32.mrf.mxu0
  %v252 = vadd.f32 0.0, %v251
  %v253 = vpop.f32.mrf.mxu0
  %254 = vmatprep.mubr.bf16.mxu0 0
  %255 = vmatmul.mubr.bf16.gmra.mxu0 %v123
  %v256 = vpop.f32.mrf.mxu0
  %v257 = vadd.f32 0.0, %v256
  %v258 = vpop.f32.mrf.mxu0
  %v259 = vpop.f32.mrf.mxu0
  %v260 = vadd.f32 0.0, %v259
  %v261 = vpop.f32.mrf.mxu0
  %262 = vmatprep.mubr.bf16.mxu0 0
  %263 = vmatmul.mubr.bf16.gmra.mxu0 %v124
  %v264 = vpop.f32.mrf.mxu0
  %v265 = vadd.f32 0.0, %v264
  %v266 = vpop.f32.mrf.mxu0
  %v267 = vpop.f32.mrf.mxu0
  %v268 = vadd.f32 0.0, %v267
  %v269 = vpop.f32.mrf.mxu0
  %270 = vmatprep.mubr.bf16.mxu0 0
  %271 = vmatmul.mubr.bf16.gmra.mxu0 %v125
  %v272 = vpop.f32.mrf.mxu0
  %v273 = vadd.f32 0.0, %v272
  %v274 = vpop.f32.mrf.mxu0
  %v275 = vpop.f32.mrf.mxu0
  %v276 = vadd.f32 0.0, %v275
  %v277 = vpop.f32.mrf.mxu0
  %278 = vdwg.mxu0
  %v279 = vadd.f32 %v38, %v217
  %v280 = vadd.f32 %v39, %v220
  %v281 = vadd.f32 %v40, %v225
  %v282 = vadd.f32 %v41, %v228
  %v283 = vadd.f32 %v42, %v233
  %v284 = vadd.f32 %v43, %v236
  %v285 = vadd.f32 %v44, %v241
  %v286 = vadd.f32 %v45, %v244
  %v287 = vadd.f32 %v46, %v249
  %v288 = vadd.f32 %v47, %v252
  %v289 = vadd.f32 %v48, %v257
  %v290 = vadd.f32 %v49, %v260
  %v291 = vadd.f32 %v50, %v265
  %v292 = vadd.f32 %v51, %v268
  %v293 = vadd.f32 %v52, %v273
  %v294 = vadd.f32 %v53, %v276
  %295 = vst [vmem:[#allocation2] sm:$0xff] %v279
  %296 = vst [vmem:[#allocation2 + $0x8] sm:$0xff] %v280
  %297 = vst [vmem:[#allocation2 + $0x10] sm:$0xff] %v281
  %298 = vst [vmem:[#allocation2 + $0x18] sm:$0xff] %v282
  %299 = vst [vmem:[#allocation2 + $0x20] sm:$0xff] %v283
  %300 = vst [vmem:[#allocation2 + $0x28] sm:$0xff] %v284
  %301 = vst [vmem:[#allocation2 + $0x30] sm:$0xff] %v285
  %302 = vst [vmem:[#allocation2 + $0x38] sm:$0xff] %v286
  %303 = vst [vmem:[#allocation2 + $0x40] sm:$0xff] %v287
  %304 = vst [vmem:[#allocation2 + $0x48] sm:$0xff] %v288
  %305 = vst [vmem:[#allocation2 + $0x50] sm:$0xff] %v289
  %306 = vst [vmem:[#allocation2 + $0x58] sm:$0xff] %v290
  %307 = vst [vmem:[#allocation2 + $0x60] sm:$0xff] %v291
  %308 = vst [vmem:[#allocation2 + $0x68] sm:$0xff] %v292
  %309 = vst [vmem:[#allocation2 + $0x70] sm:$0xff] %v293
  %310 = vst [vmem:[#allocation2 + $0x78] sm:$0xff] %v294
  // Predicated region
  $region22: #{bottleneck_forward.4} parent=0 // pred_check
    %p311 = pneg %p18
  $region23: #{bottleneck_forward.4} parent=0 // pred_check_branch
    %313 = sbr.rel (%p311) target = $region25
  $region24: #{bottleneck_forward.4} parent=0 // pred_region
    %v314 = vld [vmem:[#allocation2] sm:$0xff]
    %v315 = vld [vmem:[#allocation2 + $0x8] sm:$0xff]
    %v316 = vld [vmem:[#allocation2 + $0x10] sm:$0xff]
    %v317 = vld [vmem:[#allocation2 + $0x18] sm:$0xff]
    %v318 = vld [vmem:[#allocation2 + $0x20] sm:$0xff]
    %v319 = vld [vmem:[#allocation2 + $0x28] sm:$0xff]
    %v320 = vld [vmem:[#allocation2 + $0x30] sm:$0xff]
    %v321 = vld [vmem:[#allocation2 + $0x38] sm:$0xff]
    %v322 = vld [vmem:[#allocation2 + $0x40] sm:$0xff]
    %v323 = vld [vmem:[#allocation2 + $0x48] sm:$0xff]
    %v324 = vld [vmem:[#allocation2 + $0x50] sm:$0xff]
    %v325 = vld [vmem:[#allocation2 + $0x58] sm:$0xff]
    %v326 = vld [vmem:[#allocation2 + $0x60] sm:$0xff]
    %v327 = vld [vmem:[#allocation2 + $0x68] sm:$0xff]
    %v328 = vld [vmem:[#allocation2 + $0x70] sm:$0xff]
    %v329 = vld [vmem:[#allocation2 + $0x78] sm:$0xff]
    %v330 = vld [vmem:[%s2] sm:$0x1]
    %v332 = vlaneseq
    %v333 = vshrl.u32 %v332, 7
    %v334 = vsub.s32 0, %v333
    %v335 = vrot.slane %v330, %v334
    %v337 = vmul.f32 %v314, %v335
    %v338 = vmul.f32 %v315, %v335
    %v339 = vmul.f32 %v316, %v335
    %v340 = vmul.f32 %v317, %v335
    %v341 = vmul.f32 %v318, %v335
    %v342 = vmul.f32 %v319, %v335
    %v343 = vmul.f32 %v320, %v335
    %v344 = vmul.f32 %v321, %v335
    %v345 = vmul.f32 %v322, %v335
    %v346 = vmul.f32 %v323, %v335
    %v347 = vmul.f32 %v324, %v335
    %v348 = vmul.f32 %v325, %v335
    %v349 = vmul.f32 %v326, %v335
    %v350 = vmul.f32 %v327, %v335
    %v351 = vmul.f32 %v328, %v335
    %v352 = vmul.f32 %v329, %v335
    %v353 = vld [vmem:[%s3] sm:$0x1]
    %v355 = vlaneseq
    %v356 = vshrl.u32 %v355, 7
    %v357 = vsub.s32 0, %v356
    %v358 = vrot.slane %v353, %v357
    %v360 = vadd.f32 %v337, %v358
    %v361 = vadd.f32 %v338, %v358
    %v362 = vadd.f32 %v339, %v358
    %v363 = vadd.f32 %v340, %v358
    %v364 = vadd.f32 %v341, %v358
    %v365 = vadd.f32 %v342, %v358
    %v366 = vadd.f32 %v343, %v358
    %v367 = vadd.f32 %v344, %v358
    %v368 = vadd.f32 %v345, %v358
    %v369 = vadd.f32 %v346, %v358
    %v370 = vadd.f32 %v347, %v358
    %v371 = vadd.f32 %v348, %v358
    %v372 = vadd.f32 %v349, %v358
    %v373 = vadd.f32 %v350, %v358
    %v374 = vadd.f32 %v351, %v358
    %v375 = vadd.f32 %v352, %v358
    %376 = vst [vmem:[%s4] sm:$0xff] %v360
    %377 = vst [vmem:[%s4 + $0x8] sm:$0xff] %v361
    %378 = vst [vmem:[%s4 + $0x10] sm:$0xff] %v362
    %379 = vst [vmem:[%s4 + $0x18] sm:$0xff] %v363
    %380 = vst [vmem:[%s4 + $0x20] sm:$0xff] %v364
    %381 = vst [vmem:[%s4 + $0x28] sm:$0xff] %v365
    %382 = vst [vmem:[%s4 + $0x30] sm:$0xff] %v366
    %383 = vst [vmem:[%s4 + $0x38] sm:$0xff] %v367
    %384 = vst [vmem:[%s4 + $0x40] sm:$0xff] %v368
    %385 = vst [vmem:[%s4 + $0x48] sm:$0xff] %v369
    %386 = vst [vmem:[%s4 + $0x50] sm:$0xff] %v370
    %387 = vst [vmem:[%s4 + $0x58] sm:$0xff] %v371
    %388 = vst [vmem:[%s4 + $0x60] sm:$0xff] %v372
    %389 = vst [vmem:[%s4 + $0x68] sm:$0xff] %v373
    %390 = vst [vmem:[%s4 + $0x70] sm:$0xff] %v374
    %391 = vst [vmem:[%s4 + $0x78] sm:$0xff] %v375
  $region25: #{bottleneck_forward.4} parent=0 // pred_fallthru
    _
  // Predicated region
  $region26: #{bottleneck_forward.4} parent=0 // pred_check
    _
  $region27: #{bottleneck_forward.4} parent=0 // pred_check_branch
    %393 = sbr.rel (0) target = $region29
  $region28: #{bottleneck_forward.4} parent=0 // pred_region
    _
  $region29: #{bottleneck_forward.4} parent=0 // pred_fallthru
    _
  // Predicated region
  $region30: #{bottleneck_forward.4} parent=0 // pred_check
    _
  $region31: #{bottleneck_forward.4} parent=0 // pred_check_branch
    %395 = sbr.rel (0) target = $region33
  $region32: #{bottleneck_forward.4} parent=0 // pred_region
    _
  $region33: #{bottleneck_forward.4} parent=0 // pred_fallthru
    _

// kernel: bottleneck_forward.3
$region0: #{bottleneck_forward.3}
  #allocation0 [shape = 'u32[]', space=smem, size = 0x4, offset = 0x4, fixed_abs, tag = 'smem constant byte address 0x4 - core index']
  #allocation1 [shape = 'u32[144,128]{1,0:T(1,128)}', space=vmem, size = 0x12000, scoped, tag = 'internal scratch']
  #allocation2 [shape = 'f32[256,128]{1,0:T(8,128)}', space=vmem, size = 0x20000, scoped, tag = 'scratch operand']
  %s0 = inlined_call_operand.vmem [shape: bf16[512,128], index: 0, kind: input, shape index: {}]
  %s1 = inlined_call_operand.vmem [shape: bf16[128,128], index: 1, kind: input, shape index: {}]
  %s2 = inlined_call_operand.vmem [shape: f32[1,128], index: 2, kind: input, shape index: {}]
  %s3 = inlined_call_operand.vmem [shape: f32[1,128], index: 3, kind: input, shape index: {}]
  %s4 = inlined_call_operand.vmem [shape: f32[512,128], index: 4, kind: output, shape index: {}]
  %s5 = sld [smem:[#allocation0]]
  $region57: #{bottleneck_forward.3} parent=0
    _
  %s7 = ssub.s32 1, %s5
  %s8 = scalar_select 0, %s7, %s5
  loop: start=0, step=1, limit=4
  $region2: #{bottleneck_forward.3} parent=0 // loop_pre_header
    _
  $region3: #{bottleneck_forward.3} parent=0 // loop_header
    %s10 = sphi 0, %s14
    %p11 = scmp.ge.s32.totalorder %s10, 4
    %s17 = sphi 0, %s36
    %s18 = sphi 0, %s32
    %s19 = sphi 0, %s28
    %s20 = sphi 0, %s17
    %s21 = sphi 0, %s18
    %s22 = sphi 0, %s19
    %s23 = sphi 0, %s20
    %s24 = sphi 0, %s21
    %s25 = sphi 0, %s22
    %s41 = sphi 0, %s43
    %s44 = sphi 0, %s41
    %s45 = sphi 0, %s44
    %s61 = sphi 0, %s45
    %s69 = sphi 0, %s71
    %s72 = sphi 0, %s69
    %s73 = sphi 0, %s72
    %s89 = sphi 0, %s73
    %s95 = sphi 0, %s97
    %s98 = sphi 0, %s95
    %s99 = sphi 0, %s98
    %s115 = sphi 0, %s99
    %s121 = sphi 0, %s123
    %s124 = sphi 0, %s121
    %s125 = sphi 0, %s124
    %s141 = sphi 0, %s125
    %s149 = sphi 0, %s151
    %s152 = sphi 0, %s149
    %s153 = sphi 0, %s152
    %s169 = sphi 0, %s153
  $region4: #{bottleneck_forward.3} parent=0 // loop_header_branch
    %13 = sbr.rel (%p11) target = $region8
  $region5: #{bottleneck_forward.3} parent=0 // loop_body
    %s15 = ssub.s32 %s10, 1
    %s16 = ssub.s32 %s10, 2
    %s26 = sadd.s32 1, %s19
    %p27 = scmp.ge.s32.totalorder %s26, 1
    %s28 = scalar_select %p27, 0, %s26
    %s29 = sadd.s32 1, %s18
    %s30 = scalar_select %p27, %s29, %s18
    %p31 = scmp.ge.s32.totalorder %s30, 1
    %s32 = scalar_select %p31, 0, %s30
    %s33 = sadd.s32 1, %s17
    %s34 = scalar_select %p31, %s33, %s17
    %p35 = scmp.ge.s32.totalorder %s34, 2
    %s36 = scalar_select %p35, 0, %s34
    %s37 = ssub.s32 %s17, %s36
    %s38 = ssub.s32 %s19, %s28
    %s39 = sor.u32 %s37, %s38
    %p40 = scmp.eq.s32.totalorder %s39, 0
    %s42 = sadd.s32 %s41, 1
    %s43 = scalar_select %p40, %s41, %s42
    %p46 = pneg %p40
    %p47 = scmp.eq.s32.totalorder %s10, 1
    %p48 = por %p46, %p47
    %p49 = scmp.ne.s32.totalorder %s41, %s44
    %p50 = scmp.eq.s32.totalorder %s10, 0
    %p51 = por %p49, %p50
    %p52 = scmp.ne.s32.totalorder %s41, %s44
    %p53 = scmp.eq.s32.totalorder %s15, 1
    %p54 = por %p52, %p53
    %p55 = scmp.ne.s32.totalorder %s44, %s45
    %p56 = scmp.eq.s32.totalorder %s15, 0
    %p57 = por %p55, %p56
    %p58 = scmp.ne.s32.totalorder %s44, %s45
    %p59 = scmp.eq.s32.totalorder %s16, 1
    %p60 = por %p58, %p59
    %p62 = scmp.ne.s32.totalorder %s45, %s61
    %p63 = scmp.eq.s32.totalorder %s16, 0
    %p64 = por %p62, %p63
    %s65 = ssub.s32 %s19, %s28
    %s66 = ssub.s32 %s18, %s32
    %s67 = sor.u32 %s65, %s66
    %p68 = scmp.eq.s32.totalorder %s67, 0
    %s70 = sadd.s32 %s69, 1
    %s71 = scalar_select %p68, %s69, %s70
    %p74 = pneg %p68
    %p75 = scmp.eq.s32.totalorder %s10, 1
    %p76 = por %p74, %p75
    %p77 = scmp.ne.s32.totalorder %s69, %s72
    %p78 = scmp.eq.s32.totalorder %s10, 0
    %p79 = por %p77, %p78
    %p80 = scmp.ne.s32.totalorder %s69, %s72
    %p81 = scmp.eq.s32.totalorder %s15, 1
    %p82 = por %p80, %p81
    %p83 = scmp.ne.s32.totalorder %s72, %s73
    %p84 = scmp.eq.s32.totalorder %s15, 0
    %p85 = por %p83, %p84
    %p86 = scmp.ne.s32.totalorder %s72, %s73
    %p87 = scmp.eq.s32.totalorder %s16, 1
    %p88 = por %p86, %p87
    %p90 = scmp.ne.s32.totalorder %s73, %s89
    %p91 = scmp.eq.s32.totalorder %s16, 0
    %p92 = por %p90, %p91
    %s93 = ssub.s32 %s18, %s32
    %p94 = scmp.eq.s32.totalorder %s93, 0
    %s96 = sadd.s32 %s95, 1
    %s97 = scalar_select %p94, %s95, %s96
    %p100 = pneg %p94
    %p101 = scmp.eq.s32.totalorder %s10, 1
    %p102 = por %p100, %p101
    %p103 = scmp.ne.s32.totalorder %s95, %s98
    %p104 = scmp.eq.s32.totalorder %s10, 0
    %p105 = por %p103, %p104
    %p106 = scmp.ne.s32.totalorder %s95, %s98
    %p107 = scmp.eq.s32.totalorder %s15, 1
    %p108 = por %p106, %p107
    %p109 = scmp.ne.s32.totalorder %s98, %s99
    %p110 = scmp.eq.s32.totalorder %s15, 0
    %p111 = por %p109, %p110
    %p112 = scmp.ne.s32.totalorder %s98, %s99
    %p113 = scmp.eq.s32.totalorder %s16, 1
    %p114 = por %p112, %p113
    %p116 = scmp.ne.s32.totalorder %s99, %s115
    %p117 = scmp.eq.s32.totalorder %s16, 0
    %p118 = por %p116, %p117
    %s119 = ssub.s32 %s18, %s32
    %p120 = scmp.eq.s32.totalorder %s119, 0
    %s122 = sadd.s32 %s121, 1
    %s123 = scalar_select %p120, %s121, %s122
    %p126 = pneg %p120
    %p127 = scmp.eq.s32.totalorder %s10, 1
    %p128 = por %p126, %p127
    %p129 = scmp.ne.s32.totalorder %s121, %s124
    %p130 = scmp.eq.s32.totalorder %s10, 0
    %p131 = por %p129, %p130
    %p132 = scmp.ne.s32.totalorder %s121, %s124
    %p133 = scmp.eq.s32.totalorder %s15, 1
    %p134 = por %p132, %p133
    %p135 = scmp.ne.s32.totalorder %s124, %s125
    %p136 = scmp.eq.s32.totalorder %s15, 0
    %p137 = por %p135, %p136
    %p138 = scmp.ne.s32.totalorder %s124, %s125
    %p139 = scmp.eq.s32.totalorder %s16, 1
    %p140 = por %p138, %p139
    %p142 = scmp.ne.s32.totalorder %s125, %s141
    %p143 = scmp.eq.s32.totalorder %s16, 0
    %p144 = por %p142, %p143
    %s145 = ssub.s32 %s17, %s36
    %s146 = ssub.s32 %s18, %s32
    %s147 = sor.u32 %s145, %s146
    %p148 = scmp.eq.s32.totalorder %s147, 0
    %s150 = sadd.s32 %s149, 1
    %s151 = scalar_select %p148, %s149, %s150
    %p154 = pneg %p148
    %p155 = scmp.eq.s32.totalorder %s10, 1
    %p156 = por %p154, %p155
    %p157 = scmp.ne.s32.totalorder %s149, %s152
    %p158 = scmp.eq.s32.totalorder %s10, 0
    %p159 = por %p157, %p158
    %p160 = scmp.ne.s32.totalorder %s149, %s152
    %p161 = scmp.eq.s32.totalorder %s15, 1
    %p162 = por %p160, %p161
    %p163 = scmp.ne.s32.totalorder %s152, %s153
    %p164 = scmp.eq.s32.totalorder %s15, 0
    %p165 = por %p163, %p164
    %p166 = scmp.ne.s32.totalorder %s152, %s153
    %p167 = scmp.eq.s32.totalorder %s16, 1
    %p168 = por %p166, %p167
    %p170 = scmp.ne.s32.totalorder %s153, %s169
    %p171 = scmp.eq.s32.totalorder %s16, 0
    %p172 = por %p170, %p171
    %p173 = scmp.le.s32.totalorder 1, %s10
    %p174 = scmp.lt.s32.totalorder %s10, 3
    %p175 = pnand %p173, %p174
    %p176 = pneg %p175
    // Predicated region
    $region9: #{bottleneck_forward.3} parent=5 // pred_check
      _
    $region10: #{bottleneck_forward.3} parent=5 // pred_check_branch
      %178 = sbr.rel (%p175) target = $region12
    $region11: #{bottleneck_forward.3} parent=5 // pred_region
      %s179 = ssub.s32 %s10, 1
      // Predicated region
      $region13: #{bottleneck_forward.3} parent=11 // pred_check
        %p180 = pneg %p85
      $region14: #{bottleneck_forward.3} parent=11 // pred_check_branch
        %182 = sbr.rel (%p180) target = $region16
      $region15: #{bottleneck_forward.3} parent=11 // pred_region
        %s183 = smul.u32 16, %s22
        %p184 = scmp.lt.s32.totalorder %s183, 15
        %s185 = scalar_select %p184, %s183, 15
        %p186 = scmp.lt.s32.totalorder %s21, 0
        %s187 = scalar_select %p186, %s21, 0
        %s188 = sadd.s32 %s187, %s185
        %s189 = smul.addr %s188, 4
        %s190 = scalar_lea.vmem %s1, %s189
        %s191 = smul.u32 16, %s22
      $region16: #{bottleneck_forward.3} parent=11 // pred_fallthru
        _
      // Predicated region
      $region17: #{bottleneck_forward.3} parent=11 // pred_check
        %p192 = pneg %p111
      $region18: #{bottleneck_forward.3} parent=11 // pred_check_branch
        %194 = sbr.rel (%p192) target = $region20
      $region19: #{bottleneck_forward.3} parent=11 // pred_region
        %p195 = scmp.lt.s32.totalorder %s21, 0
        %s196 = scalar_select %p195, %s21, 0
        %s197 = scalar_lea.vmem %s2, %s196
      $region20: #{bottleneck_forward.3} parent=11 // pred_fallthru
        _
      // Predicated region
      $region21: #{bottleneck_forward.3} parent=11 // pred_check
        %p198 = pneg %p137
      $region22: #{bottleneck_forward.3} parent=11 // pred_check_branch
        %200 = sbr.rel (%p198) target = $region24
      $region23: #{bottleneck_forward.3} parent=11 // pred_region
        %p201 = scmp.lt.s32.totalorder %s21, 0
        %s202 = scalar_select %p201, %s21, 0
        %s203 = scalar_lea.vmem %s3, %s202
      $region24: #{bottleneck_forward.3} parent=11 // pred_fallthru
        _
    $region12: #{bottleneck_forward.3} parent=5 // pred_fallthru
      _
    %p204 = scmp.lt.s32.totalorder %s10, 2
    // Predicated region
    $region25: #{bottleneck_forward.3} parent=5 // pred_check
      %p205 = pneg %p204
    $region26: #{bottleneck_forward.3} parent=5 // pred_check_branch
      %207 = sbr.rel (%p205) target = $region28
    $region27: #{bottleneck_forward.3} parent=5 // pred_region
      // Predicated region
      $region29: #{bottleneck_forward.3} parent=27 // pred_check
        %p208 = pneg %p51
      $region30: #{bottleneck_forward.3} parent=27 // pred_check_branch
        %210 = sbr.rel (%p208) target = $region32
      $region31: #{bottleneck_forward.3} parent=27 // pred_region
        %s211 = smul.u32 32, %s17
        %p212 = scmp.lt.s32.totalorder %s211, 63
        %s213 = scalar_select %p212, %s211, 63
        %p214 = scmp.lt.s32.totalorder %s19, 0
        %s215 = scalar_select %p214, %s19, 0
        %s216 = sadd.s32 %s215, %s213
        %s217 = smul.addr %s216, 4
        %s218 = scalar_lea.vmem %s0, %s217
        %s219 = smul.u32 32, %s17
      $region32: #{bottleneck_forward.3} parent=27 // pred_fallthru
        _
    $region28: #{bottleneck_forward.3} parent=5 // pred_fallthru
      _
    %p220 = scmp.le.s32.totalorder 1, %s10
    %p221 = scmp.lt.s32.totalorder %s10, 3
    %p222 = pnand %p220, %p221
    %p223 = pneg %p222
    // Predicated region
    $region33: #{bottleneck_forward.3} parent=5 // pred_check
      _
    $region34: #{bottleneck_forward.3} parent=5 // pred_check_branch
      %225 = sbr.rel (%p222) target = $region36
    $region35: #{bottleneck_forward.3} parent=5 // pred_region
      %s226 = ssub.s32 %s10, 1
      %s227 = smul.u32 32, %s20
      %p228 = scmp.lt.s32.totalorder %s227, 63
      %s229 = scalar_select %p228, %s227, 63
      %p230 = scmp.lt.s32.totalorder %s22, 0
      %s231 = scalar_select %p230, %s22, 0
      %s232 = sadd.s32 %s231, %s229
      %s233 = smul.addr %s232, 4
      %s234 = scalar_lea.vmem %s0, %s233
      %p235 = pneg %p57
      %p236 = pneg %p54
      %s237 = smul.u32 16, %s22
      %p238 = scmp.lt.s32.totalorder %s237, 15
      %s239 = scalar_select %p238, %s237, 15
      %p240 = scmp.lt.s32.totalorder %s21, 0
      %s241 = scalar_select %p240, %s21, 0
      %s242 = sadd.s32 %s241, %s239
      %s243 = smul.addr %s242, 4
      %s244 = scalar_lea.vmem %s1, %s243
      %p245 = pneg %p85
      %p246 = pneg %p82
      %p247 = scmp.lt.s32.totalorder %s21, 0
      %s248 = scalar_select %p247, %s21, 0
      %s249 = scalar_lea.vmem %s2, %s248
      %p250 = pneg %p111
      %p251 = pneg %p108
      %p252 = scmp.lt.s32.totalorder %s21, 0
      %s253 = scalar_select %p252, %s21, 0
      %s254 = scalar_lea.vmem %s3, %s253
      %p255 = pneg %p137
      %p256 = pneg %p134
      %p257 = pneg %p165
      %p258 = pneg %p162
      %s259 = smul.u32 32, %s20
      %p260 = scmp.lt.s32.totalorder %s259, 63
      %s261 = scalar_select %p260, %s259, 63
      %p262 = scmp.lt.s32.totalorder %s21, 0
      %s263 = scalar_select %p262, %s21, 0
      %s264 = sadd.s32 %s263, %s261
      %s265 = smul.addr %s264, 8
      %s266 = scalar_lea.vmem %s4, %s265
      %s267 = smul.u32 32, %s20
      %p268 = scmp.lt.s32.totalorder %s267, 63
      %s269 = scalar_select %p268, %s267, 63
      %p270 = scmp.lt.s32.totalorder %s22, 0
      %s271 = scalar_select %p270, %s22, 0
      %s272 = sadd.s32 %s271, %s269
      %s273 = smul.addr %s272, 4
      %s274 = scalar_lea.vmem %s0, %s273
      %s275 = smul.u32 32, %s20
      %s276 = smul.u32 16, %s22
      %p277 = scmp.lt.s32.totalorder %s276, 15
      %s278 = scalar_select %p277, %s276, 15
      %p279 = scmp.lt.s32.totalorder %s21, 0
      %s280 = scalar_select %p279, %s21, 0
      %s281 = sadd.s32 %s280, %s278
      %s282 = smul.addr %s281, 4
      %s283 = scalar_lea.vmem %s1, %s282
      %s284 = smul.u32 16, %s22
      %p285 = scmp.lt.s32.totalorder %s21, 0
      %s286 = scalar_select %p285, %s21, 0
      %s287 = scalar_lea.vmem %s2, %s286
      %p288 = scmp.lt.s32.totalorder %s21, 0
      %s289 = scalar_select %p288, %s21, 0
      %s290 = scalar_lea.vmem %s3, %s289
      %s291 = smul.u32 32, %s20
      %p292 = scmp.lt.s32.totalorder %s291, 63
      %s293 = scalar_select %p292, %s291, 63
      %p294 = scmp.lt.s32.totalorder %s21, 0
      %s295 = scalar_select %p294, %s21, 0
      %s296 = sadd.s32 %s295, %s293
      %s297 = smul.addr %s296, 8
      %s298 = scalar_lea.vmem %s4, %s297
      %s299 = smul.u32 32, %s20
      %p301 = scmp.eq.s32.totalorder %s22, 0
      // Predicated region
      $region37: #{bottleneck_forward.3} parent=35 // pred_check
        %p302 = pneg %p301
      $region38: #{bottleneck_forward.3} parent=35 // pred_check_branch
        %304 = sbr.rel (%p302) target = $region40
      $region39: #{bottleneck_forward.3} parent=35 // pred_region
        %305 = vst [vmem:[#allocation2] sm:$0xff] 0.0
        %306 = vst [vmem:[#allocation2 + $0x8] sm:$0xff] 0.0
        %307 = vst [vmem:[#allocation2 + $0x10] sm:$0xff] 0.0
        %308 = vst [vmem:[#allocation2 + $0x18] sm:$0xff] 0.0
        %309 = vst [vmem:[#allocation2 + $0x20] sm:$0xff] 0.0
        %310 = vst [vmem:[#allocation2 + $0x28] sm:$0xff] 0.0
        %311 = vst [vmem:[#allocation2 + $0x30] sm:$0xff] 0.0
        %312 = vst [vmem:[#allocation2 + $0x38] sm:$0xff] 0.0
        %313 = vst [vmem:[#allocation2 + $0x40] sm:$0xff] 0.0
        %314 = vst [vmem:[#allocation2 + $0x48] sm:$0xff] 0.0
        %315 = vst [vmem:[#allocation2 + $0x50] sm:$0xff] 0.0
        %316 = vst [vmem:[#allocation2 + $0x58] sm:$0xff] 0.0
        %317 = vst [vmem:[#allocation2 + $0x60] sm:$0xff] 0.0
        %318 = vst [vmem:[#allocation2 + $0x68] sm:$0xff] 0.0
        %319 = vst [vmem:[#allocation2 + $0x70] sm:$0xff] 0.0
        %320 = vst [vmem:[#allocation2 + $0x78] sm:$0xff] 0.0
        %321 = vst [vmem:[#allocation2 + $0x80] sm:$0xff] 0.0
        %322 = vst [vmem:[#allocation2 + $0x88] sm:$0xff] 0.0
        %323 = vst [vmem:[#allocation2 + $0x90] sm:$0xff] 0.0
        %324 = vst [vmem:[#allocation2 + $0x98] sm:$0xff] 0.0
        %325 = vst [vmem:[#allocation2 + $0xa0] sm:$0xff] 0.0
        %326 = vst [vmem:[#allocation2 + $0xa8] sm:$0xff] 0.0
        %327 = vst [vmem:[#allocation2 + $0xb0] sm:$0xff] 0.0
        %328 = vst [vmem:[#allocation2 + $0xb8] sm:$0xff] 0.0
        %329 = vst [vmem:[#allocation2 + $0xc0] sm:$0xff] 0.0
        %330 = vst [vmem:[#allocation2 + $0xc8] sm:$0xff] 0.0
        %331 = vst [vmem:[#allocation2 + $0xd0] sm:$0xff] 0.0
        %332 = vst [vmem:[#allocation2 + $0xd8] sm:$0xff] 0.0
        %333 = vst [vmem:[#allocation2 + $0xe0] sm:$0xff] 0.0
        %334 = vst [vmem:[#allocation2 + $0xe8] sm:$0xff] 0.0
        %335 = vst [vmem:[#allocation2 + $0xf0] sm:$0xff] 0.0
        %336 = vst [vmem:[#allocation2 + $0xf8] sm:$0xff] 0.0
      $region40: #{bottleneck_forward.3} parent=35 // pred_fallthru
        _
      %v337 = vld [vmem:[#allocation2] sm:$0xff]
      %v338 = vld [vmem:[#allocation2 + $0x8] sm:$0xff]
      %v339 = vld [vmem:[#allocation2 + $0x10] sm:$0xff]
      %v340 = vld [vmem:[#allocation2 + $0x18] sm:$0xff]
      %v341 = vld [vmem:[#allocation2 + $0x20] sm:$0xff]
      %v342 = vld [vmem:[#allocation2 + $0x28] sm:$0xff]
      %v343 = vld [vmem:[#allocation2 + $0x30] sm:$0xff]
      %v344 = vld [vmem:[#allocation2 + $0x38] sm:$0xff]
      %v345 = vld [vmem:[#allocation2 + $0x40] sm:$0xff]
      %v346 = vld [vmem:[#allocation2 + $0x48] sm:$0xff]
      %v347 = vld [vmem:[#allocation2 + $0x50] sm:$0xff]
      %v348 = vld [vmem:[#allocation2 + $0x58] sm:$0xff]
      %v349 = vld [vmem:[#allocation2 + $0x60] sm:$0xff]
      %v350 = vld [vmem:[#allocation2 + $0x68] sm:$0xff]
      %v351 = vld [vmem:[#allocation2 + $0x70] sm:$0xff]
      %v352 = vld [vmem:[#allocation2 + $0x78] sm:$0xff]
      %v353 = vld [vmem:[#allocation2 + $0x80] sm:$0xff]
      %v354 = vld [vmem:[#allocation2 + $0x88] sm:$0xff]
      %v355 = vld [vmem:[#allocation2 + $0x90] sm:$0xff]
      %v356 = vld [vmem:[#allocation2 + $0x98] sm:$0xff]
      %v357 = vld [vmem:[#allocation2 + $0xa0] sm:$0xff]
      %v358 = vld [vmem:[#allocation2 + $0xa8] sm:$0xff]
      %v359 = vld [vmem:[#allocation2 + $0xb0] sm:$0xff]
      %v360 = vld [vmem:[#allocation2 + $0xb8] sm:$0xff]
      %v361 = vld [vmem:[#allocation2 + $0xc0] sm:$0xff]
      %v362 = vld [vmem:[#allocation2 + $0xc8] sm:$0xff]
      %v363 = vld [vmem:[#allocation2 + $0xd0] sm:$0xff]
      %v364 = vld [vmem:[#allocation2 + $0xd8] sm:$0xff]
      %v365 = vld [vmem:[#allocation2 + $0xe0] sm:$0xff]
      %v366 = vld [vmem:[#allocation2 + $0xe8] sm:$0xff]
      %v367 = vld [vmem:[#allocation2 + $0xf0] sm:$0xff]
      %v368 = vld [vmem:[#allocation2 + $0xf8] sm:$0xff]
      %v369 = vld [vmem:[%s274] sm:$0xf]
      %v370 = vld [vmem:[%s274 + $0x4] sm:$0xf]
      %v371 = vld [vmem:[%s274 + $0x8] sm:$0xf]
      %v372 = vld [vmem:[%s274 + $0xc] sm:$0xf]
      %v373 = vld [vmem:[%s274 + $0x10] sm:$0xf]
      %v374 = vld [vmem:[%s274 + $0x14] sm:$0xf]
      %v375 = vld [vmem:[%s274 + $0x18] sm:$0xf]
      %v376 = vld [vmem:[%s274 + $0x1c] sm:$0xf]
      %v377 = vld [vmem:[%s274 + $0x20] sm:$0xf]
      %v378 = vld [vmem:[%s274 + $0x24] sm:$0xf]
      %v379 = vld [vmem:[%s274 + $0x28] sm:$0xf]
      %v380 = vld [vmem:[%s274 + $0x2c] sm:$0xf]
      %v381 = vld [vmem:[%s274 + $0x30] sm:$0xf]
      %v382 = vld [vmem:[%s274 + $0x34] sm:$0xf]
      %v383 = vld [vmem:[%s274 + $0x38] sm:$0xf]
      %v384 = vld [vmem:[%s274 + $0x3c] sm:$0xf]
      %v385 = vld [vmem:[%s274 + $0x40] sm:$0xf]
      %v386 = vld [vmem:[%s274 + $0x44] sm:$0xf]
      %v387 = vld [vmem:[%s274 + $0x48] sm:$0xf]
      %v388 = vld [vmem:[%s274 + $0x4c] sm:$0xf]
      %v389 = vld [vmem:[%s274 + $0x50] sm:$0xf]
      %v390 = vld [vmem:[%s274 + $0x54] sm:$0xf]
      %v391 = vld [vmem:[%s274 + $0x58] sm:$0xf]
      %v392 = vld [vmem:[%s274 + $0x5c] sm:$0xf]
      %v393 = vld [vmem:[%s274 + $0x60] sm:$0xf]
      %v394 = vld [vmem:[%s274 + $0x64] sm:$0xf]
      %v395 = vld [vmem:[%s274 + $0x68] sm:$0xf]
      %v396 = vld [vmem:[%s274 + $0x6c] sm:$0xf]
      %v397 = vld [vmem:[%s274 + $0x70] sm:$0xf]
      %v398 = vld [vmem:[%s274 + $0x74] sm:$0xf]
      %v399 = vld [vmem:[%s274 + $0x78] sm:$0xf]
      %v400 = vld [vmem:[%s274 + $0x7c] sm:$0xf]
      %v401 = vld [vmem:[%s283] sm:$0xf]
      %v402 = vld [vmem:[%s283 + $0x4] sm:$0xf]
      %v403 = vld [vmem:[%s283 + $0x8] sm:$0xf]
      %v404 = vld [vmem:[%s283 + $0xc] sm:$0xf]
      %v405 = vld [vmem:[%s283 + $0x10] sm:$0xf]
      %v406 = vld [vmem:[%s283 + $0x14] sm:$0xf]
      %v407 = vld [vmem:[%s283 + $0x18] sm:$0xf]
      %v408 = vld [vmem:[%s283 + $0x1c] sm:$0xf]
      %v409 = vld [vmem:[%s283 + $0x20] sm:$0xf]
      %v410 = vld [vmem:[%s283 + $0x24] sm:$0xf]
      %v411 = vld [vmem:[%s283 + $0x28] sm:$0xf]
      %v412 = vld [vmem:[%s283 + $0x2c] sm:$0xf]
      %v413 = vld [vmem:[%s283 + $0x30] sm:$0xf]
      %v414 = vld [vmem:[%s283 + $0x34] sm:$0xf]
      %v415 = vld [vmem:[%s283 + $0x38] sm:$0xf]
      %v416 = vld [vmem:[%s283 + $0x3c] sm:$0xf]
      %v449 = vunpack.c.l.b16 %v369
      %v450 = vunpack.c.l.b16 %v370
      %v451 = vunpack.c.l.b16 %v371
      %v452 = vunpack.c.l.b16 %v372
      %v453 = vunpack.c.l.b16 %v373
      %v454 = vunpack.c.l.b16 %v374
      %v455 = vunpack.c.l.b16 %v375
      %v456 = vunpack.c.l.b16 %v376
      %v457 = vunpack.c.l.b16 %v377
      %v458 = vunpack.c.l.b16 %v378
      %v459 = vunpack.c.l.b16 %v379
      %v460 = vunpack.c.l.b16 %v380
      %v461 = vunpack.c.l.b16 %v381
      %v462 = vunpack.c.l.b16 %v382
      %v463 = vunpack.c.l.b16 %v383
      %v464 = vunpack.c.l.b16 %v384
      %v465 = vunpack.c.l.b16 %v385
      %v466 = vunpack.c.l.b16 %v386
      %v467 = vunpack.c.l.b16 %v387
      %v468 = vunpack.c.l.b16 %v388
      %v469 = vunpack.c.l.b16 %v389
      %v470 = vunpack.c.l.b16 %v390
      %v471 = vunpack.c.l.b16 %v391
      %v472 = vunpack.c.l.b16 %v392
      %v473 = vunpack.c.l.b16 %v393
      %v474 = vunpack.c.l.b16 %v394
      %v475 = vunpack.c.l.b16 %v395
      %v476 = vunpack.c.l.b16 %v396
      %v477 = vunpack.c.l.b16 %v397
      %v478 = vunpack.c.l.b16 %v398
      %v479 = vunpack.c.l.b16 %v399
      %v480 = vunpack.c.l.b16 %v400
      %v481 = vpack.c.b16 %v450, %v449
      %v482 = vpack.c.b16 %v452, %v451
      %v483 = vpack.c.b16 %v454, %v453
      %v484 = vpack.c.b16 %v456, %v455
      %v485 = vpack.c.b16 %v458, %v457
      %v486 = vpack.c.b16 %v460, %v459
      %v487 = vpack.c.b16 %v462, %v461
      %v488 = vpack.c.b16 %v464, %v463
      %v489 = vpack.c.b16 %v466, %v465
      %v490 = vpack.c.b16 %v468, %v467
      %v491 = vpack.c.b16 %v470, %v469
      %v492 = vpack.c.b16 %v472, %v471
      %v493 = vpack.c.b16 %v474, %v473
      %v494 = vpack.c.b16 %v476, %v475
      %v495 = vpack.c.b16 %v478, %v477
      %v496 = vpack.c.b16 %v480, %v479
      %v529 = vunpack.c.l.b16 %v401
      %v530 = vunpack.c.l.b16 %v402
      %v531 = vunpack.c.l.b16 %v403
      %v532 = vunpack.c.l.b16 %v404
      %v533 = vunpack.c.l.b16 %v405
      %v534 = vunpack.c.l.b16 %v406
      %v535 = vunpack.c.l.b16 %v407
      %v536 = vunpack.c.l.b16 %v408
      %v537 = vunpack.c.l.b16 %v409
      %v538 = vunpack.c.l.b16 %v410
      %v539 = vunpack.c.l.b16 %v411
      %v540 = vunpack.c.l.b16 %v412
      %v541 = vunpack.c.l.b16 %v413
      %v542 = vunpack.c.l.b16 %v414
      %v543 = vunpack.c.l.b16 %v415
      %v544 = vunpack.c.l.b16 %v416
      %v545 = vpack.c.b16 %v530, %v529
      %v546 = vpack.c.b16 %v532, %v531
      %v547 = vpack.c.b16 %v534, %v533
      %v548 = vpack.c.b16 %v536, %v535
      %v549 = vpack.c.b16 %v538, %v537
      %v550 = vpack.c.b16 %v540, %v539
      %v551 = vpack.c.b16 %v542, %v541
      %v552 = vpack.c.b16 %v544, %v543
      %561 = vmatprep.subr.bf16.mxu0 0
      %562 = vmatpush1.bf16.msra.mxu0 %v552
      %563 = vmatprep.subr.bf16.mxu0 0
      %564 = vmatpush1.bf16.msra.mxu0 %v551
      %565 = vmatprep.subr.bf16.mxu0 0
      %566 = vmatpush1.bf16.msra.mxu0 %v550
      %567 = vmatprep.subr.bf16.mxu0 0
      %568 = vmatpush1.bf16.msra.mxu0 %v549
      %569 = vmatprep.subr.bf16.mxu0 0
      %570 = vmatpush1.bf16.msra.mxu0 %v548
      %571 = vmatprep.subr.bf16.mxu0 0
      %572 = vmatpush1.bf16.msra.mxu0 %v547
      %573 = vmatprep.subr.bf16.mxu0 0
      %574 = vmatpush1.bf16.msra.mxu0 %v546
      %575 = vmatprep.subr.bf16.mxu0 0
      %576 = vmatpush1.bf16.msra.mxu0 %v545
      %577 = vmatprep.subr.bf16.mxu0 0
      %578 = vmatpush2.bf16.msra.mxu0 0
      %579 = vmatprep.subr.bf16.mxu0 0
      %580 = vmatpush2.bf16.msra.mxu0 0
      %581 = vmatprep.subr.bf16.mxu0 0
      %582 = vmatpush2.bf16.msra.mxu0 0
      %583 = vmatprep.subr.bf16.mxu0 0
      %584 = vmatpush2.bf16.msra.mxu0 0
      %585 = vmatprep.subr.bf16.mxu0 0
      %586 = vmatpush2.bf16.msra.mxu0 0
      %587 = vmatprep.subr.bf16.mxu0 0
      %588 = vmatpush2.bf16.msra.mxu0 0
      %589 = vmatprep.subr.bf16.mxu0 0
      %590 = vmatpush2.bf16.msra.mxu0 0
      %591 = vmatprep.subr.bf16.mxu0 0
      %592 = vmatpush2.bf16.msra.mxu0 0
      %593 = vmatprep.mubr.bf16.mxu0 0
      %594 = vmatmul.mubr.bf16.gmra.mxu0 %v481
      %v595 = vpop.f32.mrf.mxu0
      %v596 = vadd.f32 0.0, %v595
      %v597 = vpop.f32.mrf.mxu0
      %v598 = vpop.f32.mrf.mxu0
      %v599 = vadd.f32 0.0, %v598
      %v600 = vpop.f32.mrf.mxu0
      %601 = vmatprep.mubr.bf16.mxu0 0
      %602 = vmatmul.mubr.bf16.gmra.mxu0 %v482
      %v603 = vpop.f32.mrf.mxu0
      %v604 = vadd.f32 0.0, %v603
      %v605 = vpop.f32.mrf.mxu0
      %v606 = vpop.f32.mrf.mxu0
      %v607 = vadd.f32 0.0, %v606
      %v608 = vpop.f32.mrf.mxu0
      %609 = vmatprep.mubr.bf16.mxu0 0
      %610 = vmatmul.mubr.bf16.gmra.mxu0 %v483
      %v611 = vpop.f32.mrf.mxu0
      %v612 = vadd.f32 0.0, %v611
      %v613 = vpop.f32.mrf.mxu0
      %v614 = vpop.f32.mrf.mxu0
      %v615 = vadd.f32 0.0, %v614
      %v616 = vpop.f32.mrf.mxu0
      %617 = vmatprep.mubr.bf16.mxu0 0
      %618 = vmatmul.mubr.bf16.gmra.mxu0 %v484
      %v619 = vpop.f32.mrf.mxu0
      %v620 = vadd.f32 0.0, %v619
      %v621 = vpop.f32.mrf.mxu0
      %v622 = vpop.f32.mrf.mxu0
      %v623 = vadd.f32 0.0, %v622
      %v624 = vpop.f32.mrf.mxu0
      %625 = vmatprep.mubr.bf16.mxu0 0
      %626 = vmatmul.mubr.bf16.gmra.mxu0 %v485
      %v627 = vpop.f32.mrf.mxu0
      %v628 = vadd.f32 0.0, %v627
      %v629 = vpop.f32.mrf.mxu0
      %v630 = vpop.f32.mrf.mxu0
      %v631 = vadd.f32 0.0, %v630
      %v632 = vpop.f32.mrf.mxu0
      %633 = vmatprep.mubr.bf16.mxu0 0
      %634 = vmatmul.mubr.bf16.gmra.mxu0 %v486
      %v635 = vpop.f32.mrf.mxu0
      %v636 = vadd.f32 0.0, %v635
      %v637 = vpop.f32.mrf.mxu0
      %v638 = vpop.f32.mrf.mxu0
      %v639 = vadd.f32 0.0, %v638
      %v640 = vpop.f32.mrf.mxu0
      %641 = vmatprep.mubr.bf16.mxu0 0
      %642 = vmatmul.mubr.bf16.gmra.mxu0 %v487
      %v643 = vpop.f32.mrf.mxu0
      %v644 = vadd.f32 0.0, %v643
      %v645 = vpop.f32.mrf.mxu0
      %v646 = vpop.f32.mrf.mxu0
      %v647 = vadd.f32 0.0, %v646
      %v648 = vpop.f32.mrf.mxu0
      %649 = vmatprep.mubr.bf16.mxu0 0
      %650 = vmatmul.mubr.bf16.gmra.mxu0 %v488
      %v651 = vpop.f32.mrf.mxu0
      %v652 = vadd.f32 0.0, %v651
      %v653 = vpop.f32.mrf.mxu0
      %v654 = vpop.f32.mrf.mxu0
      %v655 = vadd.f32 0.0, %v654
      %v656 = vpop.f32.mrf.mxu0
      %657 = vmatprep.mubr.bf16.mxu0 0
      %658 = vmatmul.mubr.bf16.gmra.mxu0 %v489
      %v659 = vpop.f32.mrf.mxu0
      %v660 = vadd.f32 0.0, %v659
      %v661 = vpop.f32.mrf.mxu0
      %v662 = vpop.f32.mrf.mxu0
      %v663 = vadd.f32 0.0, %v662
      %v664 = vpop.f32.mrf.mxu0
      %665 = vmatprep.mubr.bf16.mxu0 0
      %666 = vmatmul.mubr.bf16.gmra.mxu0 %v490
      %v667 = vpop.f32.mrf.mxu0
      %v668 = vadd.f32 0.0, %v667
      %v669 = vpop.f32.mrf.mxu0
      %v670 = vpop.f32.mrf.mxu0
      %v671 = vadd.f32 0.0, %v670
      %v672 = vpop.f32.mrf.mxu0
      %673 = vmatprep.mubr.bf16.mxu0 0
      %674 = vmatmul.mubr.bf16.gmra.mxu0 %v491
      %v675 = vpop.f32.mrf.mxu0
      %v676 = vadd.f32 0.0, %v675
      %v677 = vpop.f32.mrf.mxu0
      %v678 = vpop.f32.mrf.mxu0
      %v679 = vadd.f32 0.0, %v678
      %v680 = vpop.f32.mrf.mxu0
      %681 = vmatprep.mubr.bf16.mxu0 0
      %682 = vmatmul.mubr.bf16.gmra.mxu0 %v492
      %v683 = vpop.f32.mrf.mxu0
      %v684 = vadd.f32 0.0, %v683
      %v685 = vpop.f32.mrf.mxu0
      %v686 = vpop.f32.mrf.mxu0
      %v687 = vadd.f32 0.0, %v686
      %v688 = vpop.f32.mrf.mxu0
      %689 = vmatprep.mubr.bf16.mxu0 0
      %690 = vmatmul.mubr.bf16.gmra.mxu0 %v493
      %v691 = vpop.f32.mrf.mxu0
      %v692 = vadd.f32 0.0, %v691
      %v693 = vpop.f32.mrf.mxu0
      %v694 = vpop.f32.mrf.mxu0
      %v695 = vadd.f32 0.0, %v694
      %v696 = vpop.f32.mrf.mxu0
      %697 = vmatprep.mubr.bf16.mxu0 0
      %698 = vmatmul.mubr.bf16.gmra.mxu0 %v494
      %v699 = vpop.f32.mrf.mxu0
      %v700 = vadd.f32 0.0, %v699
      %v701 = vpop.f32.mrf.mxu0
      %v702 = vpop.f32.mrf.mxu0
      %v703 = vadd.f32 0.0, %v702
      %v704 = vpop.f32.mrf.mxu0
      %705 = vmatprep.mubr.bf16.mxu0 0
      %706 = vmatmul.mubr.bf16.gmra.mxu0 %v495
      %v707 = vpop.f32.mrf.mxu0
      %v708 = vadd.f32 0.0, %v707
      %v709 = vpop.f32.mrf.mxu0
      %v710 = vpop.f32.mrf.mxu0
      %v711 = vadd.f32 0.0, %v710
      %v712 = vpop.f32.mrf.mxu0
      %713 = vmatprep.mubr.bf16.mxu0 0
      %714 = vmatmul.mubr.bf16.gmra.mxu0 %v496
      %v715 = vpop.f32.mrf.mxu0
      %v716 = vadd.f32 0.0, %v715
      %v717 = vpop.f32.mrf.mxu0
      %v718 = vpop.f32.mrf.mxu0
      %v719 = vadd.f32 0.0, %v718
      %v720 = vpop.f32.mrf.mxu0
      %721 = vdwg.mxu0
      %v722 = vadd.f32 %v337, %v596
      %v723 = vadd.f32 %v338, %v599
      %v724 = vadd.f32 %v339, %v604
      %v725 = vadd.f32 %v340, %v607
      %v726 = vadd.f32 %v341, %v612
      %v727 = vadd.f32 %v342, %v615
      %v728 = vadd.f32 %v343, %v620
      %v729 = vadd.f32 %v344, %v623
      %v730 = vadd.f32 %v345, %v628
      %v731 = vadd.f32 %v346, %v631
      %v732 = vadd.f32 %v347, %v636
      %v733 = vadd.f32 %v348, %v639
      %v734 = vadd.f32 %v349, %v644
      %v735 = vadd.f32 %v350, %v647
      %v736 = vadd.f32 %v351, %v652
      %v737 = vadd.f32 %v352, %v655
      %v738 = vadd.f32 %v353, %v660
      %v739 = vadd.f32 %v354, %v663
      %v740 = vadd.f32 %v355, %v668
      %v741 = vadd.f32 %v356, %v671
      %v742 = vadd.f32 %v357, %v676
      %v743 = vadd.f32 %v358, %v679
      %v744 = vadd.f32 %v359, %v684
      %v745 = vadd.f32 %v360, %v687
      %v746 = vadd.f32 %v361, %v692
      %v747 = vadd.f32 %v362, %v695
      %v748 = vadd.f32 %v363, %v700
      %v749 = vadd.f32 %v364, %v703
      %v750 = vadd.f32 %v365, %v708
      %v751 = vadd.f32 %v366, %v711
      %v752 = vadd.f32 %v367, %v716
      %v753 = vadd.f32 %v368, %v719
      %754 = vst [vmem:[#allocation2] sm:$0xff] %v722
      %755 = vst [vmem:[#allocation2 + $0x8] sm:$0xff] %v723
      %756 = vst [vmem:[#allocation2 + $0x10] sm:$0xff] %v724
      %757 = vst [vmem:[#allocation2 + $0x18] sm:$0xff] %v725
      %758 = vst [vmem:[#allocation2 + $0x20] sm:$0xff] %v726
      %759 = vst [vmem:[#allocation2 + $0x28] sm:$0xff] %v727
      %760 = vst [vmem:[#allocation2 + $0x30] sm:$0xff] %v728
      %761 = vst [vmem:[#allocation2 + $0x38] sm:$0xff] %v729
      %762 = vst [vmem:[#allocation2 + $0x40] sm:$0xff] %v730
      %763 = vst [vmem:[#allocation2 + $0x48] sm:$0xff] %v731
      %764 = vst [vmem:[#allocation2 + $0x50] sm:$0xff] %v732
      %765 = vst [vmem:[#allocation2 + $0x58] sm:$0xff] %v733
      %766 = vst [vmem:[#allocation2 + $0x60] sm:$0xff] %v734
      %767 = vst [vmem:[#allocation2 + $0x68] sm:$0xff] %v735
      %768 = vst [vmem:[#allocation2 + $0x70] sm:$0xff] %v736
      %769 = vst [vmem:[#allocation2 + $0x78] sm:$0xff] %v737
      %770 = vst [vmem:[#allocation2 + $0x80] sm:$0xff] %v738
      %771 = vst [vmem:[#allocation2 + $0x88] sm:$0xff] %v739
      %772 = vst [vmem:[#allocation2 + $0x90] sm:$0xff] %v740
      %773 = vst [vmem:[#allocation2 + $0x98] sm:$0xff] %v741
      %774 = vst [vmem:[#allocation2 + $0xa0] sm:$0xff] %v742
      %775 = vst [vmem:[#allocation2 + $0xa8] sm:$0xff] %v743
      %776 = vst [vmem:[#allocation2 + $0xb0] sm:$0xff] %v744
      %777 = vst [vmem:[#allocation2 + $0xb8] sm:$0xff] %v745
      %778 = vst [vmem:[#allocation2 + $0xc0] sm:$0xff] %v746
      %779 = vst [vmem:[#allocation2 + $0xc8] sm:$0xff] %v747
      %780 = vst [vmem:[#allocation2 + $0xd0] sm:$0xff] %v748
      %781 = vst [vmem:[#allocation2 + $0xd8] sm:$0xff] %v749
      %782 = vst [vmem:[#allocation2 + $0xe0] sm:$0xff] %v750
      %783 = vst [vmem:[#allocation2 + $0xe8] sm:$0xff] %v751
      %784 = vst [vmem:[#allocation2 + $0xf0] sm:$0xff] %v752
      %785 = vst [vmem:[#allocation2 + $0xf8] sm:$0xff] %v753
      // Predicated region
      $region41: #{bottleneck_forward.3} parent=35 // pred_check
        %p786 = pneg %p301
      $region42: #{bottleneck_forward.3} parent=35 // pred_check_branch
        %788 = sbr.rel (%p786) target = $region44
      $region43: #{bottleneck_forward.3} parent=35 // pred_region
        %v789 = vld [vmem:[#allocation2] sm:$0xff]
        %v790 = vld [vmem:[#allocation2 + $0x8] sm:$0xff]
        %v791 = vld [vmem:[#allocation2 + $0x10] sm:$0xff]
        %v792 = vld [vmem:[#allocation2 + $0x18] sm:$0xff]
        %v793 = vld [vmem:[#allocation2 + $0x20] sm:$0xff]
        %v794 = vld [vmem:[#allocation2 + $0x28] sm:$0xff]
        %v795 = vld [vmem:[#allocation2 + $0x30] sm:$0xff]
        %v796 = vld [vmem:[#allocation2 + $0x38] sm:$0xff]
        %v797 = vld [vmem:[#allocation2 + $0x40] sm:$0xff]
        %v798 = vld [vmem:[#allocation2 + $0x48] sm:$0xff]
        %v799 = vld [vmem:[#allocation2 + $0x50] sm:$0xff]
        %v800 = vld [vmem:[#allocation2 + $0x58] sm:$0xff]
        %v801 = vld [vmem:[#allocation2 + $0x60] sm:$0xff]
        %v802 = vld [vmem:[#allocation2 + $0x68] sm:$0xff]
        %v803 = vld [vmem:[#allocation2 + $0x70] sm:$0xff]
        %v804 = vld [vmem:[#allocation2 + $0x78] sm:$0xff]
        %v805 = vld [vmem:[#allocation2 + $0x80] sm:$0xff]
        %v806 = vld [vmem:[#allocation2 + $0x88] sm:$0xff]
        %v807 = vld [vmem:[#allocation2 + $0x90] sm:$0xff]
        %v808 = vld [vmem:[#allocation2 + $0x98] sm:$0xff]
        %v809 = vld [vmem:[#allocation2 + $0xa0] sm:$0xff]
        %v810 = vld [vmem:[#allocation2 + $0xa8] sm:$0xff]
        %v811 = vld [vmem:[#allocation2 + $0xb0] sm:$0xff]
        %v812 = vld [vmem:[#allocation2 + $0xb8] sm:$0xff]
        %v813 = vld [vmem:[#allocation2 + $0xc0] sm:$0xff]
        %v814 = vld [vmem:[#allocation2 + $0xc8] sm:$0xff]
        %v815 = vld [vmem:[#allocation2 + $0xd0] sm:$0xff]
        %v816 = vld [vmem:[#allocation2 + $0xd8] sm:$0xff]
        %v817 = vld [vmem:[#allocation2 + $0xe0] sm:$0xff]
        %v818 = vld [vmem:[#allocation2 + $0xe8] sm:$0xff]
        %v819 = vld [vmem:[#allocation2 + $0xf0] sm:$0xff]
        %v820 = vld [vmem:[#allocation2 + $0xf8] sm:$0xff]
        %v821 = vld [vmem:[%s287] sm:$0x1]
        %v823 = vlaneseq
        %v824 = vshrl.u32 %v823, 7
        %v825 = vsub.s32 0, %v824
        %v826 = vrot.slane %v821, %v825
        %v828 = vmul.f32 %v789, %v826
        %v829 = vmul.f32 %v790, %v826
        %v830 = vmul.f32 %v791, %v826
        %v831 = vmul.f32 %v792, %v826
        %v832 = vmul.f32 %v793, %v826
        %v833 = vmul.f32 %v794, %v826
        %v834 = vmul.f32 %v795, %v826
        %v835 = vmul.f32 %v796, %v826
        %v836 = vmul.f32 %v797, %v826
        %v837 = vmul.f32 %v798, %v826
        %v838 = vmul.f32 %v799, %v826
        %v839 = vmul.f32 %v800, %v826
        %v840 = vmul.f32 %v801, %v826
        %v841 = vmul.f32 %v802, %v826
        %v842 = vmul.f32 %v803, %v826
        %v843 = vmul.f32 %v804, %v826
        %v844 = vmul.f32 %v805, %v826
        %v845 = vmul.f32 %v806, %v826
        %v846 = vmul.f32 %v807, %v826
        %v847 = vmul.f32 %v808, %v826
        %v848 = vmul.f32 %v809, %v826
        %v849 = vmul.f32 %v810, %v826
        %v850 = vmul.f32 %v811, %v826
        %v851 = vmul.f32 %v812, %v826
        %v852 = vmul.f32 %v813, %v826
        %v853 = vmul.f32 %v814, %v826
        %v854 = vmul.f32 %v815, %v826
        %v855 = vmul.f32 %v816, %v826
        %v856 = vmul.f32 %v817, %v826
        %v857 = vmul.f32 %v818, %v826
        %v858 = vmul.f32 %v819, %v826
        %v859 = vmul.f32 %v820, %v826
        %v860 = vld [vmem:[%s290] sm:$0x1]
        %v862 = vlaneseq
        %v863 = vshrl.u32 %v862, 7
        %v864 = vsub.s32 0, %v863
        %v865 = vrot.slane %v860, %v864
        %v867 = vadd.f32 %v828, %v865
        %v868 = vadd.f32 %v829, %v865
        %v869 = vadd.f32 %v830, %v865
        %v870 = vadd.f32 %v831, %v865
        %v871 = vadd.f32 %v832, %v865
        %v872 = vadd.f32 %v833, %v865
        %v873 = vadd.f32 %v834, %v865
        %v874 = vadd.f32 %v835, %v865
        %v875 = vadd.f32 %v836, %v865
        %v876 = vadd.f32 %v837, %v865
        %v877 = vadd.f32 %v838, %v865
        %v878 = vadd.f32 %v839, %v865
        %v879 = vadd.f32 %v840, %v865
        %v880 = vadd.f32 %v841, %v865
        %v881 = vadd.f32 %v842, %v865
        %v882 = vadd.f32 %v843, %v865
        %v883 = vadd.f32 %v844, %v865
        %v884 = vadd.f32 %v845, %v865
        %v885 = vadd.f32 %v846, %v865
        %v886 = vadd.f32 %v847, %v865
        %v887 = vadd.f32 %v848, %v865
        %v888 = vadd.f32 %v849, %v865
        %v889 = vadd.f32 %v850, %v865
        %v890 = vadd.f32 %v851, %v865
        %v891 = vadd.f32 %v852, %v865
        %v892 = vadd.f32 %v853, %v865
        %v893 = vadd.f32 %v854, %v865
        %v894 = vadd.f32 %v855, %v865
        %v895 = vadd.f32 %v856, %v865
        %v896 = vadd.f32 %v857, %v865
        %v897 = vadd.f32 %v858, %v865
        %v898 = vadd.f32 %v859, %v865
        %v899 = vmax.f32 %v867, 0.0
        %v900 = vmax.f32 %v868, 0.0
        %v901 = vmax.f32 %v869, 0.0
        %v902 = vmax.f32 %v870, 0.0
        %v903 = vmax.f32 %v871, 0.0
        %v904 = vmax.f32 %v872, 0.0
        %v905 = vmax.f32 %v873, 0.0
        %v906 = vmax.f32 %v874, 0.0
        %v907 = vmax.f32 %v875, 0.0
        %v908 = vmax.f32 %v876, 0.0
        %v909 = vmax.f32 %v877, 0.0
        %v910 = vmax.f32 %v878, 0.0
        %v911 = vmax.f32 %v879, 0.0
        %v912 = vmax.f32 %v880, 0.0
        %v913 = vmax.f32 %v881, 0.0
        %v914 = vmax.f32 %v882, 0.0
        %v915 = vmax.f32 %v883, 0.0
        %v916 = vmax.f32 %v884, 0.0
        %v917 = vmax.f32 %v885, 0.0
        %v918 = vmax.f32 %v886, 0.0
        %v919 = vmax.f32 %v887, 0.0
        %v920 = vmax.f32 %v888, 0.0
        %v921 = vmax.f32 %v889, 0.0
        %v922 = vmax.f32 %v890, 0.0
        %v923 = vmax.f32 %v891, 0.0
        %v924 = vmax.f32 %v892, 0.0
        %v925 = vmax.f32 %v893, 0.0
        %v926 = vmax.f32 %v894, 0.0
        %v927 = vmax.f32 %v895, 0.0
        %v928 = vmax.f32 %v896, 0.0
        %v929 = vmax.f32 %v897, 0.0
        %v930 = vmax.f32 %v898, 0.0
        %931 = vst [vmem:[%s298] sm:$0xff] %v899
        %932 = vst [vmem:[%s298 + $0x8] sm:$0xff] %v900
        %933 = vst [vmem:[%s298 + $0x10] sm:$0xff] %v901
        %934 = vst [vmem:[%s298 + $0x18] sm:$0xff] %v902
        %935 = vst [vmem:[%s298 + $0x20] sm:$0xff] %v903
        %936 = vst [vmem:[%s298 + $0x28] sm:$0xff] %v904
        %937 = vst [vmem:[%s298 + $0x30] sm:$0xff] %v905
        %938 = vst [vmem:[%s298 + $0x38] sm:$0xff] %v906
        %939 = vst [vmem:[%s298 + $0x40] sm:$0xff] %v907
        %940 = vst [vmem:[%s298 + $0x48] sm:$0xff] %v908
        %941 = vst [vmem:[%s298 + $0x50] sm:$0xff] %v909
        %942 = vst [vmem:[%s298 + $0x58] sm:$0xff] %v910
        %943 = vst [vmem:[%s298 + $0x60] sm:$0xff] %v911
        %944 = vst [vmem:[%s298 + $0x68] sm:$0xff] %v912
        %945 = vst [vmem:[%s298 + $0x70] sm:$0xff] %v913
        %946 = vst [vmem:[%s298 + $0x78] sm:$0xff] %v914
        %947 = vst [vmem:[%s298 + $0x80] sm:$0xff] %v915
        %948 = vst [vmem:[%s298 + $0x88] sm:$0xff] %v916
        %949 = vst [vmem:[%s298 + $0x90] sm:$0xff] %v917
        %950 = vst [vmem:[%s298 + $0x98] sm:$0xff] %v918
        %951 = vst [vmem:[%s298 + $0xa0] sm:$0xff] %v919
        %952 = vst [vmem:[%s298 + $0xa8] sm:$0xff] %v920
        %953 = vst [vmem:[%s298 + $0xb0] sm:$0xff] %v921
        %954 = vst [vmem:[%s298 + $0xb8] sm:$0xff] %v922
        %955 = vst [vmem:[%s298 + $0xc0] sm:$0xff] %v923
        %956 = vst [vmem:[%s298 + $0xc8] sm:$0xff] %v924
        %957 = vst [vmem:[%s298 + $0xd0] sm:$0xff] %v925
        %958 = vst [vmem:[%s298 + $0xd8] sm:$0xff] %v926
        %959 = vst [vmem:[%s298 + $0xe0] sm:$0xff] %v927
        %960 = vst [vmem:[%s298 + $0xe8] sm:$0xff] %v928
        %961 = vst [vmem:[%s298 + $0xf0] sm:$0xff] %v929
        %962 = vst [vmem:[%s298 + $0xf8] sm:$0xff] %v930
      $region44: #{bottleneck_forward.3} parent=35 // pred_fallthru
        _
      %s963 = smul.u32 32, %s20
      %p964 = scmp.lt.s32.totalorder %s963, 63
      %s965 = scalar_select %p964, %s963, 63
      %p966 = scmp.lt.s32.totalorder %s21, 0
      %s967 = scalar_select %p966, %s21, 0
      %s968 = sadd.s32 %s967, %s965
      %s969 = smul.addr %s968, 8
      %s970 = scalar_lea.vmem %s4, %s969
      // Predicated region
      $region45: #{bottleneck_forward.3} parent=35 // pred_check
        %p971 = pneg %p162
      $region46: #{bottleneck_forward.3} parent=35 // pred_check_branch
        %973 = sbr.rel (%p971) target = $region48
      $region47: #{bottleneck_forward.3} parent=35 // pred_region
        %s974 = smul.u32 32, %s20
      $region48: #{bottleneck_forward.3} parent=35 // pred_fallthru
        _
    $region36: #{bottleneck_forward.3} parent=5 // pred_fallthru
      _
    %p975 = scmp.le.s32.totalorder 2, %s10
    // Predicated region
    $region49: #{bottleneck_forward.3} parent=5 // pred_check
      %p976 = pneg %p975
    $region50: #{bottleneck_forward.3} parent=5 // pred_check_branch
      %978 = sbr.rel (%p976) target = $region52
    $region51: #{bottleneck_forward.3} parent=5 // pred_region
      %s979 = ssub.s32 %s10, 2
      // Predicated region
      $region53: #{bottleneck_forward.3} parent=51 // pred_check
        %p980 = pneg %p168
      $region54: #{bottleneck_forward.3} parent=51 // pred_check_branch
        %982 = sbr.rel (%p980) target = $region56
      $region55: #{bottleneck_forward.3} parent=51 // pred_region
        %s983 = smul.u32 32, %s23
        %p984 = scmp.lt.s32.totalorder %s983, 63
        %s985 = scalar_select %p984, %s983, 63
        %p986 = scmp.lt.s32.totalorder %s24, 0
        %s987 = scalar_select %p986, %s24, 0
        %s988 = sadd.s32 %s987, %s985
        %s989 = smul.addr %s988, 8
        %s990 = scalar_lea.vmem %s4, %s989
      $region56: #{bottleneck_forward.3} parent=51 // pred_fallthru
        _
    $region52: #{bottleneck_forward.3} parent=5 // pred_fallthru
      _
  $region6: #{bottleneck_forward.3} parent=0 // loop_footer
    %s14 = sadd.s32 1, %s10
  $region7: #{bottleneck_forward.3} parent=0 // loop_footer_branch
    %9 = sbr.rel target = $region3
  $region8: #{bottleneck_forward.3} parent=0 // loop_exit
    _

// kernel: bottleneck_forward.5
$region0: #{bottleneck_forward.5}
  #allocation0 [shape = 'u32[]', space=smem, size = 0x4, offset = 0x4, fixed_abs, tag = 'smem constant byte address 0x4 - core index']
  #allocation1 [shape = 'u32[144,128]{1,0:T(1,128)}', space=vmem, size = 0x12000, scoped, tag = 'internal scratch']
  #allocation2 [shape = 'f32[128,128]{1,0:T(8,128)}', space=vmem, size = 0x10000, scoped, tag = 'scratch operand']
  %s0 = inlined_call_operand.vmem [shape: bf16[128,256], index: 0, kind: input, shape index: {}]
  %s1 = inlined_call_operand.vmem [shape: bf16[256,128], index: 1, kind: input, shape index: {}]
  %s2 = inlined_call_operand.vmem [shape: f32[1,128], index: 2, kind: input, shape index: {}]
  %s3 = inlined_call_operand.vmem [shape: f32[1,128], index: 3, kind: input, shape index: {}]
  %s4 = inlined_call_operand.vmem [shape: f32[128,128], index: 4, kind: input, shape index: {}]
  %s5 = inlined_call_operand.hbm [shape: f32[128,128], index: 5, kind: output, shape index: {}]
  %s6 = sld [smem:[#allocation0]]
  $region102: #{bottleneck_forward.5} parent=0
    _
  %s8 = ssub.s32 1, %s6
  %s9 = scalar_select 0, %s8, %s6
  $region1: #{bottleneck_forward.5} parent=0
    #allocation3 [shape = 'u8[65536]{0}', space=vmem, size = 0x10000, scoped, tag = 'input window, operand 0']
    #allocation4 [shape = 'u8[65536]{0}', space=vmem, size = 0x10000, scoped, tag = 'output window, operand 0, single buffered']
    #allocation5 [shape = 's32[2]{0}', space=sflag, size = 0x8, scoped, tag = 'scoped memory for bottleneck_forward.5']
    %10 = vsyncpa [#allocation5], 0
    loop: start=0, step=1, limit=4
    $region2: #{bottleneck_forward.5} parent=1 // loop_pre_header
      _
    $region3: #{bottleneck_forward.5} parent=1 // loop_header
      %s12 = sphi 0, %s16
      %p13 = scmp.ge.s32.totalorder %s12, 4
      %s19 = sphi 0, %s38
      %s20 = sphi 0, %s34
      %s21 = sphi 0, %s30
      %s22 = sphi 0, %s19
      %s23 = sphi 0, %s20
      %s24 = sphi 0, %s21
      %s25 = sphi 0, %s22
      %s26 = sphi 0, %s23
      %s27 = sphi 0, %s24
      %s43 = sphi 0, %s45
      %s46 = sphi 0, %s43
      %s47 = sphi 0, %s46
      %s63 = sphi 0, %s47
      %s71 = sphi 0, %s73
      %s74 = sphi 0, %s71
      %s75 = sphi 0, %s74
      %s91 = sphi 0, %s75
      %s97 = sphi 0, %s99
      %s100 = sphi 0, %s97
      %s101 = sphi 0, %s100
      %s117 = sphi 0, %s101
      %s123 = sphi 0, %s125
      %s126 = sphi 0, %s123
      %s127 = sphi 0, %s126
      %s143 = sphi 0, %s127
      %s151 = sphi 0, %s153
      %s154 = sphi 0, %s151
      %s155 = sphi 0, %s154
      %s171 = sphi 0, %s155
      %s179 = sphi 0, %s181
      %s182 = sphi 0, %s179
      %s183 = sphi 0, %s182
      %s199 = sphi 0, %s183
    $region4: #{bottleneck_forward.5} parent=1 // loop_header_branch
      %15 = sbr.rel (%p13) target = $region8
    $region5: #{bottleneck_forward.5} parent=1 // loop_body
      %s17 = ssub.s32 %s12, 1
      %s18 = ssub.s32 %s12, 2
      %s28 = sadd.s32 1, %s21
      %p29 = scmp.ge.s32.totalorder %s28, 2
      %s30 = scalar_select %p29, 0, %s28
      %s31 = sadd.s32 1, %s20
      %s32 = scalar_select %p29, %s31, %s20
      %p33 = scmp.ge.s32.totalorder %s32, 1
      %s34 = scalar_select %p33, 0, %s32
      %s35 = sadd.s32 1, %s19
      %s36 = scalar_select %p33, %s35, %s19
      %p37 = scmp.ge.s32.totalorder %s36, 1
      %s38 = scalar_select %p37, 0, %s36
      %s39 = ssub.s32 %s19, %s38
      %s40 = ssub.s32 %s21, %s30
      %s41 = sor.u32 %s39, %s40
      %p42 = scmp.eq.s32.totalorder %s41, 0
      %s44 = sadd.s32 %s43, 1
      %s45 = scalar_select %p42, %s43, %s44
      %p48 = pneg %p42
      %p49 = scmp.eq.s32.totalorder %s12, 1
      %p50 = por %p48, %p49
      %p51 = scmp.ne.s32.totalorder %s43, %s46
      %p52 = scmp.eq.s32.totalorder %s12, 0
      %p53 = por %p51, %p52
      %p54 = scmp.ne.s32.totalorder %s43, %s46
      %p55 = scmp.eq.s32.totalorder %s17, 1
      %p56 = por %p54, %p55
      %p57 = scmp.ne.s32.totalorder %s46, %s47
      %p58 = scmp.eq.s32.totalorder %s17, 0
      %p59 = por %p57, %p58
      %p60 = scmp.ne.s32.totalorder %s46, %s47
      %p61 = scmp.eq.s32.totalorder %s18, 1
      %p62 = por %p60, %p61
      %p64 = scmp.ne.s32.totalorder %s47, %s63
      %p65 = scmp.eq.s32.totalorder %s18, 0
      %p66 = por %p64, %p65
      %s67 = ssub.s32 %s21, %s30
      %s68 = ssub.s32 %s20, %s34
      %s69 = sor.u32 %s67, %s68
      %p70 = scmp.eq.s32.totalorder %s69, 0
      %s72 = sadd.s32 %s71, 1
      %s73 = scalar_select %p70, %s71, %s72
      %p76 = pneg %p70
      %p77 = scmp.eq.s32.totalorder %s12, 1
      %p78 = por %p76, %p77
      %p79 = scmp.ne.s32.totalorder %s71, %s74
      %p80 = scmp.eq.s32.totalorder %s12, 0
      %p81 = por %p79, %p80
      %p82 = scmp.ne.s32.totalorder %s71, %s74
      %p83 = scmp.eq.s32.totalorder %s17, 1
      %p84 = por %p82, %p83
      %p85 = scmp.ne.s32.totalorder %s74, %s75
      %p86 = scmp.eq.s32.totalorder %s17, 0
      %p87 = por %p85, %p86
      %p88 = scmp.ne.s32.totalorder %s74, %s75
      %p89 = scmp.eq.s32.totalorder %s18, 1
      %p90 = por %p88, %p89
      %p92 = scmp.ne.s32.totalorder %s75, %s91
      %p93 = scmp.eq.s32.totalorder %s18, 0
      %p94 = por %p92, %p93
      %s95 = ssub.s32 %s20, %s34
      %p96 = scmp.eq.s32.totalorder %s95, 0
      %s98 = sadd.s32 %s97, 1
      %s99 = scalar_select %p96, %s97, %s98
      %p102 = pneg %p96
      %p103 = scmp.eq.s32.totalorder %s12, 1
      %p104 = por %p102, %p103
      %p105 = scmp.ne.s32.totalorder %s97, %s100
      %p106 = scmp.eq.s32.totalorder %s12, 0
      %p107 = por %p105, %p106
      %p108 = scmp.ne.s32.totalorder %s97, %s100
      %p109 = scmp.eq.s32.totalorder %s17, 1
      %p110 = por %p108, %p109
      %p111 = scmp.ne.s32.totalorder %s100, %s101
      %p112 = scmp.eq.s32.totalorder %s17, 0
      %p113 = por %p111, %p112
      %p114 = scmp.ne.s32.totalorder %s100, %s101
      %p115 = scmp.eq.s32.totalorder %s18, 1
      %p116 = por %p114, %p115
      %p118 = scmp.ne.s32.totalorder %s101, %s117
      %p119 = scmp.eq.s32.totalorder %s18, 0
      %p120 = por %p118, %p119
      %s121 = ssub.s32 %s20, %s34
      %p122 = scmp.eq.s32.totalorder %s121, 0
      %s124 = sadd.s32 %s123, 1
      %s125 = scalar_select %p122, %s123, %s124
      %p128 = pneg %p122
      %p129 = scmp.eq.s32.totalorder %s12, 1
      %p130 = por %p128, %p129
      %p131 = scmp.ne.s32.totalorder %s123, %s126
      %p132 = scmp.eq.s32.totalorder %s12, 0
      %p133 = por %p131, %p132
      %p134 = scmp.ne.s32.totalorder %s123, %s126
      %p135 = scmp.eq.s32.totalorder %s17, 1
      %p136 = por %p134, %p135
      %p137 = scmp.ne.s32.totalorder %s126, %s127
      %p138 = scmp.eq.s32.totalorder %s17, 0
      %p139 = por %p137, %p138
      %p140 = scmp.ne.s32.totalorder %s126, %s127
      %p141 = scmp.eq.s32.totalorder %s18, 1
      %p142 = por %p140, %p141
      %p144 = scmp.ne.s32.totalorder %s127, %s143
      %p145 = scmp.eq.s32.totalorder %s18, 0
      %p146 = por %p144, %p145
      %s147 = ssub.s32 %s19, %s38
      %s148 = ssub.s32 %s20, %s34
      %s149 = sor.u32 %s147, %s148
      %p150 = scmp.eq.s32.totalorder %s149, 0
      %s152 = sadd.s32 %s151, 1
      %s153 = scalar_select %p150, %s151, %s152
      %p156 = pneg %p150
      %p157 = scmp.eq.s32.totalorder %s12, 1
      %p158 = por %p156, %p157
      %p159 = scmp.ne.s32.totalorder %s151, %s154
      %p160 = scmp.eq.s32.totalorder %s12, 0
      %p161 = por %p159, %p160
      %p162 = scmp.ne.s32.totalorder %s151, %s154
      %p163 = scmp.eq.s32.totalorder %s17, 1
      %p164 = por %p162, %p163
      %p165 = scmp.ne.s32.totalorder %s154, %s155
      %p166 = scmp.eq.s32.totalorder %s17, 0
      %p167 = por %p165, %p166
      %p168 = scmp.ne.s32.totalorder %s154, %s155
      %p169 = scmp.eq.s32.totalorder %s18, 1
      %p170 = por %p168, %p169
      %p172 = scmp.ne.s32.totalorder %s155, %s171
      %p173 = scmp.eq.s32.totalorder %s18, 0
      %p174 = por %p172, %p173
      %s175 = ssub.s32 %s19, %s38
      %s176 = ssub.s32 %s20, %s34
      %s177 = sor.u32 %s175, %s176
      %p178 = scmp.eq.s32.totalorder %s177, 0
      %s180 = sadd.s32 %s179, 1
      %s181 = scalar_select %p178, %s179, %s180
      %p184 = pneg %p178
      %p185 = scmp.eq.s32.totalorder %s12, 1
      %p186 = por %p184, %p185
      %p187 = scmp.ne.s32.totalorder %s179, %s182
      %p188 = scmp.eq.s32.totalorder %s12, 0
      %p189 = por %p187, %p188
      %p190 = scmp.ne.s32.totalorder %s179, %s182
      %p191 = scmp.eq.s32.totalorder %s17, 1
      %p192 = por %p190, %p191
      %p193 = scmp.ne.s32.totalorder %s182, %s183
      %p194 = scmp.eq.s32.totalorder %s17, 0
      %p195 = por %p193, %p194
      %p196 = scmp.ne.s32.totalorder %s182, %s183
      %p197 = scmp.eq.s32.totalorder %s18, 1
      %p198 = por %p196, %p197
      %p200 = scmp.ne.s32.totalorder %s183, %s199
      %p201 = scmp.eq.s32.totalorder %s18, 0
      %p202 = por %p200, %p201
      %p203 = scmp.le.s32.totalorder 1, %s12
      %p204 = scmp.lt.s32.totalorder %s12, 3
      %p205 = pnand %p203, %p204
      %p206 = pneg %p205
      // Predicated region
      $region9: #{bottleneck_forward.5} parent=5 // pred_check
        _
      $region10: #{bottleneck_forward.5} parent=5 // pred_check_branch
        %208 = sbr.rel (%p205) target = $region12
      $region11: #{bottleneck_forward.5} parent=5 // pred_region
        %s209 = ssub.s32 %s12, 1
        // Predicated region
        $region13: #{bottleneck_forward.5} parent=11 // pred_check
          %p210 = pneg %p113
        $region14: #{bottleneck_forward.5} parent=11 // pred_check_branch
          %212 = sbr.rel (%p210) target = $region16
        $region15: #{bottleneck_forward.5} parent=11 // pred_region
          %p213 = scmp.lt.s32.totalorder %s23, 0
          %s214 = scalar_select %p213, %s23, 0
          %s215 = scalar_lea.vmem %s2, %s214
        $region16: #{bottleneck_forward.5} parent=11 // pred_fallthru
          _
        // Predicated region
        $region17: #{bottleneck_forward.5} parent=11 // pred_check
          %p216 = pneg %p139
        $region18: #{bottleneck_forward.5} parent=11 // pred_check_branch
          %218 = sbr.rel (%p216) target = $region20
        $region19: #{bottleneck_forward.5} parent=11 // pred_region
          %p219 = scmp.lt.s32.totalorder %s23, 0
          %s220 = scalar_select %p219, %s23, 0
          %s221 = scalar_lea.vmem %s3, %s220
        $region20: #{bottleneck_forward.5} parent=11 // pred_fallthru
          _
        // Predicated region
        $region21: #{bottleneck_forward.5} parent=11 // pred_check
          %p222 = pneg %p167
        $region22: #{bottleneck_forward.5} parent=11 // pred_check_branch
          %224 = sbr.rel (%p222) target = $region24
        $region23: #{bottleneck_forward.5} parent=11 // pred_region
          %s225 = smul.u32 16, %s22
          %p226 = scmp.lt.s32.totalorder %s225, 15
          %s227 = scalar_select %p226, %s225, 15
          %p228 = scmp.lt.s32.totalorder %s23, 0
          %s229 = scalar_select %p228, %s23, 0
          %s230 = sadd.s32 %s229, %s227
          %s231 = smul.addr %s230, 8
          %s232 = scalar_lea.vmem %s4, %s231
          %s233 = smul.u32 16, %s22
        $region24: #{bottleneck_forward.5} parent=11 // pred_fallthru
          _
      $region12: #{bottleneck_forward.5} parent=5 // pred_fallthru
        _
      %p234 = scmp.lt.s32.totalorder %s12, 2
      // Predicated region
      $region25: #{bottleneck_forward.5} parent=5 // pred_check
        %p235 = pneg %p234
      $region26: #{bottleneck_forward.5} parent=5 // pred_check_branch
        %237 = sbr.rel (%p235) target = $region28
      $region27: #{bottleneck_forward.5} parent=5 // pred_region
        // Predicated region
        $region29: #{bottleneck_forward.5} parent=27 // pred_check
          %p238 = pneg %p53
        $region30: #{bottleneck_forward.5} parent=27 // pred_check_branch
          %240 = sbr.rel (%p238) target = $region32
        $region31: #{bottleneck_forward.5} parent=27 // pred_region
          %s241 = sand.u32 %s43, 1
          %s242 = sand.u32 %s43, 1
          %s243 = smul.addr %s242, 64
          %s244 = scalar_lea.vmem [#allocation3], %s243
          %s245 = smul.u32 16, %s19
          %s246 = smul.addr %s245, 2
          %s247 = sadd.s32 %s21, %s246
          %s248 = smul.addr %s247, 4
          %s249 = scalar_lea.vmem %s0, %s248
          // Predicated region
          $region33: #{bottleneck_forward.5} parent=31 // pred_check
            _
          $region34: #{bottleneck_forward.5} parent=31 // pred_check_branch
            %251 = sbr.rel (0) target = $region36
          $region35: #{bottleneck_forward.5} parent=31 // pred_region
            // Predicated region
            $region37: #{bottleneck_forward.5} parent=35 // pred_check
              _
            $region38: #{bottleneck_forward.5} parent=35 // pred_check_branch
              %253 = sbr.rel target = $region40
            $region39: #{bottleneck_forward.5} parent=35 // pred_region
              // Predicated region
              $region52: #{bottleneck_forward.5} parent=39 // pred_check
                _
              $region53: #{bottleneck_forward.5} parent=39 // pred_check_branch
                %299 = sbr.rel (0) target = $region55
              $region54: #{bottleneck_forward.5} parent=39 // pred_region
                loop: start=0, step=1, limit=1
                $region56: #{bottleneck_forward.5} parent=54 // loop_pre_header
                  _
                $region57: #{bottleneck_forward.5} parent=54 // loop_header
                  %s301 = sphi 0, %s305
                  %p302 = scmp.ge.s32.totalorder %s301, 1
                  %s306 = sphi %s249, %s249
                  %s307 = sphi %s244, %s244
                $region58: #{bottleneck_forward.5} parent=54 // loop_header_branch
                  %304 = sbr.rel (%p302) target = $region62
                $region59: #{bottleneck_forward.5} parent=54 // loop_body
                  _
                $region60: #{bottleneck_forward.5} parent=54 // loop_footer
                  %s305 = sadd.s32 1, %s301
                $region61: #{bottleneck_forward.5} parent=54 // loop_footer_branch
                  %300 = sbr.rel target = $region57
                $region62: #{bottleneck_forward.5} parent=54 // loop_exit
                  _
                %s309 = ssub.s32 16, 1
                loop: start=0, step=1, limit=1
                $region63: #{bottleneck_forward.5} parent=54 // loop_pre_header
                  _
                $region64: #{bottleneck_forward.5} parent=54 // loop_header
                  %s311 = sphi 0, %s315
                  %p312 = scmp.ge.s32.totalorder %s311, 1
                  %s316 = sphi %s249, %s249
                  %s317 = sphi %s244, %s244
                $region65: #{bottleneck_forward.5} parent=54 // loop_header_branch
                  %314 = sbr.rel (%p312) target = $region69
                $region66: #{bottleneck_forward.5} parent=54 // loop_body
                  %v318 = vld [vmem:[%s316] sm:%s309]
                  %319 = vst [vmem:[%s317] sm:%s309] %v318
                  %v320 = vld [vmem:[%s316 + $0x8] sm:%s309]
                  %321 = vst [vmem:[%s317 + $0x4] sm:%s309] %v320
                  %v322 = vld [vmem:[%s316 + $0x10] sm:%s309]
                  %323 = vst [vmem:[%s317 + $0x8] sm:%s309] %v322
                  %v324 = vld [vmem:[%s316 + $0x18] sm:%s309]
                  %325 = vst [vmem:[%s317 + $0xc] sm:%s309] %v324
                  %v326 = vld [vmem:[%s316 + $0x20] sm:%s309]
                  %327 = vst [vmem:[%s317 + $0x10] sm:%s309] %v326
                  %v328 = vld [vmem:[%s316 + $0x28] sm:%s309]
                  %329 = vst [vmem:[%s317 + $0x14] sm:%s309] %v328
                  %v330 = vld [vmem:[%s316 + $0x30] sm:%s309]
                  %331 = vst [vmem:[%s317 + $0x18] sm:%s309] %v330
                  %v332 = vld [vmem:[%s316 + $0x38] sm:%s309]
                  %333 = vst [vmem:[%s317 + $0x1c] sm:%s309] %v332
                  %v334 = vld [vmem:[%s316 + $0x40] sm:%s309]
                  %335 = vst [vmem:[%s317 + $0x20] sm:%s309] %v334
                  %v336 = vld [vmem:[%s316 + $0x48] sm:%s309]
                  %337 = vst [vmem:[%s317 + $0x24] sm:%s309] %v336
                  %v338 = vld [vmem:[%s316 + $0x50] sm:%s309]
                  %339 = vst [vmem:[%s317 + $0x28] sm:%s309] %v338
                  %v340 = vld [vmem:[%s316 + $0x58] sm:%s309]
                  %341 = vst [vmem:[%s317 + $0x2c] sm:%s309] %v340
                  %v342 = vld [vmem:[%s316 + $0x60] sm:%s309]
                  %343 = vst [vmem:[%s317 + $0x30] sm:%s309] %v342
                  %v344 = vld [vmem:[%s316 + $0x68] sm:%s309]
                  %345 = vst [vmem:[%s317 + $0x34] sm:%s309] %v344
                  %v346 = vld [vmem:[%s316 + $0x70] sm:%s309]
                  %347 = vst [vmem:[%s317 + $0x38] sm:%s309] %v346
                  %v348 = vld [vmem:[%s316 + $0x78] sm:%s309]
                  %349 = vst [vmem:[%s317 + $0x3c] sm:%s309] %v348
                $region67: #{bottleneck_forward.5} parent=54 // loop_footer
                  %s315 = sadd.s32 1, %s311
                $region68: #{bottleneck_forward.5} parent=54 // loop_footer_branch
                  %310 = sbr.rel target = $region64
                $region69: #{bottleneck_forward.5} parent=54 // loop_exit
                  _
              $region55: #{bottleneck_forward.5} parent=39 // pred_fallthru
                _
            $region40: #{bottleneck_forward.5} parent=35 // pred_fallthru
              _
            // Predicated region
            $region41: #{bottleneck_forward.5} parent=35 // pred_check
              _
            $region42: #{bottleneck_forward.5} parent=35 // pred_check_branch
              %255 = sbr.rel (0) target = $region44
            $region43: #{bottleneck_forward.5} parent=35 // pred_region
              %s257 = ssub.s32 16, 1
              loop: start=0, step=1, limit=1
              $region45: #{bottleneck_forward.5} parent=43 // loop_pre_header
                _
              $region46: #{bottleneck_forward.5} parent=43 // loop_header
                %s259 = sphi 0, %s263
                %p260 = scmp.ge.s32.totalorder %s259, 1
                %s264 = sphi %s249, %s249
                %s265 = sphi %s244, %s244
              $region47: #{bottleneck_forward.5} parent=43 // loop_header_branch
                %262 = sbr.rel (%p260) target = $region51
              $region48: #{bottleneck_forward.5} parent=43 // loop_body
                %v266 = vld [vmem:[%s264] sm:%s257]
                %267 = vst [vmem:[%s265] sm:%s257] %v266
                %v268 = vld [vmem:[%s264 + $0x8] sm:%s257]
                %269 = vst [vmem:[%s265 + $0x4] sm:%s257] %v268
                %v270 = vld [vmem:[%s264 + $0x10] sm:%s257]
                %271 = vst [vmem:[%s265 + $0x8] sm:%s257] %v270
                %v272 = vld [vmem:[%s264 + $0x18] sm:%s257]
                %273 = vst [vmem:[%s265 + $0xc] sm:%s257] %v272
                %v274 = vld [vmem:[%s264 + $0x20] sm:%s257]
                %275 = vst [vmem:[%s265 + $0x10] sm:%s257] %v274
                %v276 = vld [vmem:[%s264 + $0x28] sm:%s257]
                %277 = vst [vmem:[%s265 + $0x14] sm:%s257] %v276
                %v278 = vld [vmem:[%s264 + $0x30] sm:%s257]
                %279 = vst [vmem:[%s265 + $0x18] sm:%s257] %v278
                %v280 = vld [vmem:[%s264 + $0x38] sm:%s257]
                %281 = vst [vmem:[%s265 + $0x1c] sm:%s257] %v280
                %v282 = vld [vmem:[%s264 + $0x40] sm:%s257]
                %283 = vst [vmem:[%s265 + $0x20] sm:%s257] %v282
                %v284 = vld [vmem:[%s264 + $0x48] sm:%s257]
                %285 = vst [vmem:[%s265 + $0x24] sm:%s257] %v284
                %v286 = vld [vmem:[%s264 + $0x50] sm:%s257]
                %287 = vst [vmem:[%s265 + $0x28] sm:%s257] %v286
                %v288 = vld [vmem:[%s264 + $0x58] sm:%s257]
                %289 = vst [vmem:[%s265 + $0x2c] sm:%s257] %v288
                %v290 = vld [vmem:[%s264 + $0x60] sm:%s257]
                %291 = vst [vmem:[%s265 + $0x30] sm:%s257] %v290
                %v292 = vld [vmem:[%s264 + $0x68] sm:%s257]
                %293 = vst [vmem:[%s265 + $0x34] sm:%s257] %v292
                %v294 = vld [vmem:[%s264 + $0x70] sm:%s257]
                %295 = vst [vmem:[%s265 + $0x38] sm:%s257] %v294
                %v296 = vld [vmem:[%s264 + $0x78] sm:%s257]
                %297 = vst [vmem:[%s265 + $0x3c] sm:%s257] %v296
              $region49: #{bottleneck_forward.5} parent=43 // loop_footer
                %s263 = sadd.s32 1, %s259
              $region50: #{bottleneck_forward.5} parent=43 // loop_footer_branch
                %258 = sbr.rel target = $region46
              $region51: #{bottleneck_forward.5} parent=43 // loop_exit
                _
            $region44: #{bottleneck_forward.5} parent=35 // pred_fallthru
              _
          $region36: #{bottleneck_forward.5} parent=31 // pred_fallthru
            _
          %350 = vnop
        $region32: #{bottleneck_forward.5} parent=27 // pred_fallthru
          _
        // Predicated region
        $region70: #{bottleneck_forward.5} parent=27 // pred_check
          %p351 = pneg %p81
        $region71: #{bottleneck_forward.5} parent=27 // pred_check_branch
          %353 = sbr.rel (%p351) target = $region73
        $region72: #{bottleneck_forward.5} parent=27 // pred_region
          %s354 = smul.u32 16, %s21
          %p355 = scmp.lt.s32.totalorder %s354, 31
          %s356 = scalar_select %p355, %s354, 31
          %p357 = scmp.lt.s32.totalorder %s20, 0
          %s358 = scalar_select %p357, %s20, 0
          %s359 = sadd.s32 %s358, %s356
          %s360 = smul.addr %s359, 4
          %s361 = scalar_lea.vmem %s1, %s360
          %s362 = smul.u32 16, %s21
        $region73: #{bottleneck_forward.5} parent=27 // pred_fallthru
          _
      $region28: #{bottleneck_forward.5} parent=5 // pred_fallthru
        _
      %p363 = scmp.le.s32.totalorder 1, %s12
      %p364 = scmp.lt.s32.totalorder %s12, 3
      %p365 = pnand %p363, %p364
      %p366 = pneg %p365
      // Predicated region
      $region74: #{bottleneck_forward.5} parent=5 // pred_check
        _
      $region75: #{bottleneck_forward.5} parent=5 // pred_check_branch
        %368 = sbr.rel (%p365) target = $region77
      $region76: #{bottleneck_forward.5} parent=5 // pred_region
        %s369 = ssub.s32 %s12, 1
        %s370 = sand.u32 %s46, 1
        %s371 = sand.u32 %s46, 1
        %s372 = smul.addr %s371, 64
        %s373 = scalar_lea.vmem [#allocation3], %s372
        // Predicated region
        $region78: #{bottleneck_forward.5} parent=76 // pred_check
          %p374 = pneg %p59
        $region79: #{bottleneck_forward.5} parent=76 // pred_check_branch
          %376 = sbr.rel (%p374) target = $region81
        $region80: #{bottleneck_forward.5} parent=76 // pred_region
          _
        $region81: #{bottleneck_forward.5} parent=76 // pred_fallthru
          _
        %s377 = sand.u32 %s46, 1
        %s378 = sand.u32 %s46, 1
        %s379 = smul.addr %s378, 64
        %s380 = scalar_lea.vmem [#allocation3], %s379
        %p381 = pneg %p59
        %p382 = pneg %p56
        %s383 = smul.u32 16, %s24
        %p384 = scmp.lt.s32.totalorder %s383, 31
        %s385 = scalar_select %p384, %s383, 31
        %p386 = scmp.lt.s32.totalorder %s23, 0
        %s387 = scalar_select %p386, %s23, 0
        %s388 = sadd.s32 %s387, %s385
        %s389 = smul.addr %s388, 4
        %s390 = scalar_lea.vmem %s1, %s389
        %p391 = pneg %p87
        %p392 = pneg %p84
        %p393 = scmp.lt.s32.totalorder %s23, 0
        %s394 = scalar_select %p393, %s23, 0
        %s395 = scalar_lea.vmem %s2, %s394
        %p396 = pneg %p113
        %p397 = pneg %p110
        %p398 = scmp.lt.s32.totalorder %s23, 0
        %s399 = scalar_select %p398, %s23, 0
        %s400 = scalar_lea.vmem %s3, %s399
        %p401 = pneg %p139
        %p402 = pneg %p136
        %s403 = smul.u32 16, %s22
        %p404 = scmp.lt.s32.totalorder %s403, 15
        %s405 = scalar_select %p404, %s403, 15
        %p406 = scmp.lt.s32.totalorder %s23, 0
        %s407 = scalar_select %p406, %s23, 0
        %s408 = sadd.s32 %s407, %s405
        %s409 = smul.addr %s408, 8
        %s410 = scalar_lea.vmem %s4, %s409
        %p411 = pneg %p167
        %p412 = pneg %p164
        %p413 = pneg %p195
        %p414 = pneg %p192
        %s415 = smul.u32 16, %s22
        %s416 = smul.u32 16, %s24
        %p417 = scmp.lt.s32.totalorder %s416, 31
        %s418 = scalar_select %p417, %s416, 31
        %p419 = scmp.lt.s32.totalorder %s23, 0
        %s420 = scalar_select %p419, %s23, 0
        %s421 = sadd.s32 %s420, %s418
        %s422 = smul.addr %s421, 4
        %s423 = scalar_lea.vmem %s1, %s422
        %s424 = smul.u32 16, %s24
        %p425 = scmp.lt.s32.totalorder %s23, 0
        %s426 = scalar_select %p425, %s23, 0
        %s427 = scalar_lea.vmem %s2, %s426
        %p428 = scmp.lt.s32.totalorder %s23, 0
        %s429 = scalar_select %p428, %s23, 0
        %s430 = scalar_lea.vmem %s3, %s429
        %s431 = smul.u32 16, %s22
        %p432 = scmp.lt.s32.totalorder %s431, 15
        %s433 = scalar_select %p432, %s431, 15
        %p434 = scmp.lt.s32.totalorder %s23, 0
        %s435 = scalar_select %p434, %s23, 0
        %s436 = sadd.s32 %s435, %s433
        %s437 = smul.addr %s436, 8
        %s438 = scalar_lea.vmem %s4, %s437
        %s439 = smul.u32 16, %s22
        %s440 = smul.u32 16, %s22
        %p442 = scmp.eq.s32.totalorder %s24, 0
        // Predicated region
        $region82: #{bottleneck_forward.5} parent=76 // pred_check
          %p443 = pneg %p442
        $region83: #{bottleneck_forward.5} parent=76 // pred_check_branch
          %445 = sbr.rel (%p443) target = $region85
        $region84: #{bottleneck_forward.5} parent=76 // pred_region
          %446 = vst [vmem:[#allocation2] sm:$0xff] 0.0
          %447 = vst [vmem:[#allocation2 + $0x8] sm:$0xff] 0.0
          %448 = vst [vmem:[#allocation2 + $0x10] sm:$0xff] 0.0
          %449 = vst [vmem:[#allocation2 + $0x18] sm:$0xff] 0.0
          %450 = vst [vmem:[#allocation2 + $0x20] sm:$0xff] 0.0
          %451 = vst [vmem:[#allocation2 + $0x28] sm:$0xff] 0.0
          %452 = vst [vmem:[#allocation2 + $0x30] sm:$0xff] 0.0
          %453 = vst [vmem:[#allocation2 + $0x38] sm:$0xff] 0.0
          %454 = vst [vmem:[#allocation2 + $0x40] sm:$0xff] 0.0
          %455 = vst [vmem:[#allocation2 + $0x48] sm:$0xff] 0.0
          %456 = vst [vmem:[#allocation2 + $0x50] sm:$0xff] 0.0
          %457 = vst [vmem:[#allocation2 + $0x58] sm:$0xff] 0.0
          %458 = vst [vmem:[#allocation2 + $0x60] sm:$0xff] 0.0
          %459 = vst [vmem:[#allocation2 + $0x68] sm:$0xff] 0.0
          %460 = vst [vmem:[#allocation2 + $0x70] sm:$0xff] 0.0
          %461 = vst [vmem:[#allocation2 + $0x78] sm:$0xff] 0.0
        $region85: #{bottleneck_forward.5} parent=76 // pred_fallthru
          _
        %v462 = vld [vmem:[#allocation2] sm:$0xff]
        %v463 = vld [vmem:[#allocation2 + $0x8] sm:$0xff]
        %v464 = vld [vmem:[#allocation2 + $0x10] sm:$0xff]
        %v465 = vld [vmem:[#allocation2 + $0x18] sm:$0xff]
        %v466 = vld [vmem:[#allocation2 + $0x20] sm:$0xff]
        %v467 = vld [vmem:[#allocation2 + $0x28] sm:$0xff]
        %v468 = vld [vmem:[#allocation2 + $0x30] sm:$0xff]
        %v469 = vld [vmem:[#allocation2 + $0x38] sm:$0xff]
        %v470 = vld [vmem:[#allocation2 + $0x40] sm:$0xff]
        %v471 = vld [vmem:[#allocation2 + $0x48] sm:$0xff]
        %v472 = vld [vmem:[#allocation2 + $0x50] sm:$0xff]
        %v473 = vld [vmem:[#allocation2 + $0x58] sm:$0xff]
        %v474 = vld [vmem:[#allocation2 + $0x60] sm:$0xff]
        %v475 = vld [vmem:[#allocation2 + $0x68] sm:$0xff]
        %v476 = vld [vmem:[#allocation2 + $0x70] sm:$0xff]
        %v477 = vld [vmem:[#allocation2 + $0x78] sm:$0xff]
        %v478 = vld [vmem:[%s373] sm:$0xf]
        %v479 = vld [vmem:[%s373 + $0x4] sm:$0xf]
        %v480 = vld [vmem:[%s373 + $0x8] sm:$0xf]
        %v481 = vld [vmem:[%s373 + $0xc] sm:$0xf]
        %v482 = vld [vmem:[%s373 + $0x10] sm:$0xf]
        %v483 = vld [vmem:[%s373 + $0x14] sm:$0xf]
        %v484 = vld [vmem:[%s373 + $0x18] sm:$0xf]
        %v485 = vld [vmem:[%s373 + $0x1c] sm:$0xf]
        %v486 = vld [vmem:[%s373 + $0x20] sm:$0xf]
        %v487 = vld [vmem:[%s373 + $0x24] sm:$0xf]
        %v488 = vld [vmem:[%s373 + $0x28] sm:$0xf]
        %v489 = vld [vmem:[%s373 + $0x2c] sm:$0xf]
        %v490 = vld [vmem:[%s373 + $0x30] sm:$0xf]
        %v491 = vld [vmem:[%s373 + $0x34] sm:$0xf]
        %v492 = vld [vmem:[%s373 + $0x38] sm:$0xf]
        %v493 = vld [vmem:[%s373 + $0x3c] sm:$0xf]
        %v494 = vld [vmem:[%s423] sm:$0xf]
        %v495 = vld [vmem:[%s423 + $0x4] sm:$0xf]
        %v496 = vld [vmem:[%s423 + $0x8] sm:$0xf]
        %v497 = vld [vmem:[%s423 + $0xc] sm:$0xf]
        %v498 = vld [vmem:[%s423 + $0x10] sm:$0xf]
        %v499 = vld [vmem:[%s423 + $0x14] sm:$0xf]
        %v500 = vld [vmem:[%s423 + $0x18] sm:$0xf]
        %v501 = vld [vmem:[%s423 + $0x1c] sm:$0xf]
        %v502 = vld [vmem:[%s423 + $0x20] sm:$0xf]
        %v503 = vld [vmem:[%s423 + $0x24] sm:$0xf]
        %v504 = vld [vmem:[%s423 + $0x28] sm:$0xf]
        %v505 = vld [vmem:[%s423 + $0x2c] sm:$0xf]
        %v506 = vld [vmem:[%s423 + $0x30] sm:$0xf]
        %v507 = vld [vmem:[%s423 + $0x34] sm:$0xf]
        %v508 = vld [vmem:[%s423 + $0x38] sm:$0xf]
        %v509 = vld [vmem:[%s423 + $0x3c] sm:$0xf]
        %v526 = vunpack.c.l.b16 %v478
        %v527 = vunpack.c.l.b16 %v479
        %v528 = vunpack.c.l.b16 %v480
        %v529 = vunpack.c.l.b16 %v481
        %v530 = vunpack.c.l.b16 %v482
        %v531 = vunpack.c.l.b16 %v483
        %v532 = vunpack.c.l.b16 %v484
        %v533 = vunpack.c.l.b16 %v485
        %v534 = vunpack.c.l.b16 %v486
        %v535 = vunpack.c.l.b16 %v487
        %v536 = vunpack.c.l.b16 %v488
        %v537 = vunpack.c.l.b16 %v489
        %v538 = vunpack.c.l.b16 %v490
        %v539 = vunpack.c.l.b16 %v491
        %v540 = vunpack.c.l.b16 %v492
        %v541 = vunpack.c.l.b16 %v493
        %v542 = vpack.c.b16 %v527, %v526
        %v543 = vpack.c.b16 %v529, %v528
        %v544 = vpack.c.b16 %v531, %v530
        %v545 = vpack.c.b16 %v533, %v532
        %v546 = vpack.c.b16 %v535, %v534
        %v547 = vpack.c.b16 %v537, %v536
        %v548 = vpack.c.b16 %v539, %v538
        %v549 = vpack.c.b16 %v541, %v540
        %v574 = vunpack.c.l.b16 %v494
        %v575 = vunpack.c.l.b16 %v495
        %v576 = vunpack.c.l.b16 %v496
        %v577 = vunpack.c.l.b16 %v497
        %v578 = vunpack.c.l.b16 %v498
        %v579 = vunpack.c.l.b16 %v499
        %v580 = vunpack.c.l.b16 %v500
        %v581 = vunpack.c.l.b16 %v501
        %v582 = vunpack.c.l.b16 %v502
        %v583 = vunpack.c.l.b16 %v503
        %v584 = vunpack.c.l.b16 %v504
        %v585 = vunpack.c.l.b16 %v505
        %v586 = vunpack.c.l.b16 %v506
        %v587 = vunpack.c.l.b16 %v507
        %v588 = vunpack.c.l.b16 %v508
        %v589 = vunpack.c.l.b16 %v509
        %v590 = vpack.c.b16 %v575, %v574
        %v591 = vpack.c.b16 %v577, %v576
        %v592 = vpack.c.b16 %v579, %v578
        %v593 = vpack.c.b16 %v581, %v580
        %v594 = vpack.c.b16 %v583, %v582
        %v595 = vpack.c.b16 %v585, %v584
        %v596 = vpack.c.b16 %v587, %v586
        %v597 = vpack.c.b16 %v589, %v588
        %606 = vmatprep.subr.bf16.mxu0 0
        %607 = vmatpush1.bf16.msra.mxu0 %v597
        %608 = vmatprep.subr.bf16.mxu0 0
        %609 = vmatpush1.bf16.msra.mxu0 %v596
        %610 = vmatprep.subr.bf16.mxu0 0
        %611 = vmatpush1.bf16.msra.mxu0 %v595
        %612 = vmatprep.subr.bf16.mxu0 0
        %613 = vmatpush1.bf16.msra.mxu0 %v594
        %614 = vmatprep.subr.bf16.mxu0 0
        %615 = vmatpush1.bf16.msra.mxu0 %v593
        %616 = vmatprep.subr.bf16.mxu0 0
        %617 = vmatpush1.bf16.msra.mxu0 %v592
        %618 = vmatprep.subr.bf16.mxu0 0
        %619 = vmatpush1.bf16.msra.mxu0 %v591
        %620 = vmatprep.subr.bf16.mxu0 0
        %621 = vmatpush1.bf16.msra.mxu0 %v590
        %622 = vmatprep.subr.bf16.mxu0 0
        %623 = vmatpush2.bf16.msra.mxu0 0
        %624 = vmatprep.subr.bf16.mxu0 0
        %625 = vmatpush2.bf16.msra.mxu0 0
        %626 = vmatprep.subr.bf16.mxu0 0
        %627 = vmatpush2.bf16.msra.mxu0 0
        %628 = vmatprep.subr.bf16.mxu0 0
        %629 = vmatpush2.bf16.msra.mxu0 0
        %630 = vmatprep.subr.bf16.mxu0 0
        %631 = vmatpush2.bf16.msra.mxu0 0
        %632 = vmatprep.subr.bf16.mxu0 0
        %633 = vmatpush2.bf16.msra.mxu0 0
        %634 = vmatprep.subr.bf16.mxu0 0
        %635 = vmatpush2.bf16.msra.mxu0 0
        %636 = vmatprep.subr.bf16.mxu0 0
        %637 = vmatpush2.bf16.msra.mxu0 0
        %638 = vmatprep.mubr.bf16.mxu0 0
        %639 = vmatmul.mubr.bf16.gmra.mxu0 %v542
        %v640 = vpop.f32.mrf.mxu0
        %v641 = vadd.f32 0.0, %v640
        %v642 = vpop.f32.mrf.mxu0
        %v643 = vpop.f32.mrf.mxu0
        %v644 = vadd.f32 0.0, %v643
        %v645 = vpop.f32.mrf.mxu0
        %646 = vmatprep.mubr.bf16.mxu0 0
        %647 = vmatmul.mubr.bf16.gmra.mxu0 %v543
        %v648 = vpop.f32.mrf.mxu0
        %v649 = vadd.f32 0.0, %v648
        %v650 = vpop.f32.mrf.mxu0
        %v651 = vpop.f32.mrf.mxu0
        %v652 = vadd.f32 0.0, %v651
        %v653 = vpop.f32.mrf.mxu0
        %654 = vmatprep.mubr.bf16.mxu0 0
        %655 = vmatmul.mubr.bf16.gmra.mxu0 %v544
        %v656 = vpop.f32.mrf.mxu0
        %v657 = vadd.f32 0.0, %v656
        %v658 = vpop.f32.mrf.mxu0
        %v659 = vpop.f32.mrf.mxu0
        %v660 = vadd.f32 0.0, %v659
        %v661 = vpop.f32.mrf.mxu0
        %662 = vmatprep.mubr.bf16.mxu0 0
        %663 = vmatmul.mubr.bf16.gmra.mxu0 %v545
        %v664 = vpop.f32.mrf.mxu0
        %v665 = vadd.f32 0.0, %v664
        %v666 = vpop.f32.mrf.mxu0
        %v667 = vpop.f32.mrf.mxu0
        %v668 = vadd.f32 0.0, %v667
        %v669 = vpop.f32.mrf.mxu0
        %670 = vmatprep.mubr.bf16.mxu0 0
        %671 = vmatmul.mubr.bf16.gmra.mxu0 %v546
        %v672 = vpop.f32.mrf.mxu0
        %v673 = vadd.f32 0.0, %v672
        %v674 = vpop.f32.mrf.mxu0
        %v675 = vpop.f32.mrf.mxu0
        %v676 = vadd.f32 0.0, %v675
        %v677 = vpop.f32.mrf.mxu0
        %678 = vmatprep.mubr.bf16.mxu0 0
        %679 = vmatmul.mubr.bf16.gmra.mxu0 %v547
        %v680 = vpop.f32.mrf.mxu0
        %v681 = vadd.f32 0.0, %v680
        %v682 = vpop.f32.mrf.mxu0
        %v683 = vpop.f32.mrf.mxu0
        %v684 = vadd.f32 0.0, %v683
        %v685 = vpop.f32.mrf.mxu0
        %686 = vmatprep.mubr.bf16.mxu0 0
        %687 = vmatmul.mubr.bf16.gmra.mxu0 %v548
        %v688 = vpop.f32.mrf.mxu0
        %v689 = vadd.f32 0.0, %v688
        %v690 = vpop.f32.mrf.mxu0
        %v691 = vpop.f32.mrf.mxu0
        %v692 = vadd.f32 0.0, %v691
        %v693 = vpop.f32.mrf.mxu0
        %694 = vmatprep.mubr.bf16.mxu0 0
        %695 = vmatmul.mubr.bf16.gmra.mxu0 %v549
        %v696 = vpop.f32.mrf.mxu0
        %v697 = vadd.f32 0.0, %v696
        %v698 = vpop.f32.mrf.mxu0
        %v699 = vpop.f32.mrf.mxu0
        %v700 = vadd.f32 0.0, %v699
        %v701 = vpop.f32.mrf.mxu0
        %702 = vdwg.mxu0
        %v703 = vadd.f32 %v462, %v641
        %v704 = vadd.f32 %v463, %v644
        %v705 = vadd.f32 %v464, %v649
        %v706 = vadd.f32 %v465, %v652
        %v707 = vadd.f32 %v466, %v657
        %v708 = vadd.f32 %v467, %v660
        %v709 = vadd.f32 %v468, %v665
        %v710 = vadd.f32 %v469, %v668
        %v711 = vadd.f32 %v470, %v673
        %v712 = vadd.f32 %v471, %v676
        %v713 = vadd.f32 %v472, %v681
        %v714 = vadd.f32 %v473, %v684
        %v715 = vadd.f32 %v474, %v689
        %v716 = vadd.f32 %v475, %v692
        %v717 = vadd.f32 %v476, %v697
        %v718 = vadd.f32 %v477, %v700
        %719 = vst [vmem:[#allocation2] sm:$0xff] %v703
        %720 = vst [vmem:[#allocation2 + $0x8] sm:$0xff] %v704
        %721 = vst [vmem:[#allocation2 + $0x10] sm:$0xff] %v705
        %722 = vst [vmem:[#allocation2 + $0x18] sm:$0xff] %v706
        %723 = vst [vmem:[#allocation2 + $0x20] sm:$0xff] %v707
        %724 = vst [vmem:[#allocation2 + $0x28] sm:$0xff] %v708
        %725 = vst [vmem:[#allocation2 + $0x30] sm:$0xff] %v709
        %726 = vst [vmem:[#allocation2 + $0x38] sm:$0xff] %v710
        %727 = vst [vmem:[#allocation2 + $0x40] sm:$0xff] %v711
        %728 = vst [vmem:[#allocation2 + $0x48] sm:$0xff] %v712
        %729 = vst [vmem:[#allocation2 + $0x50] sm:$0xff] %v713
        %730 = vst [vmem:[#allocation2 + $0x58] sm:$0xff] %v714
        %731 = vst [vmem:[#allocation2 + $0x60] sm:$0xff] %v715
        %732 = vst [vmem:[#allocation2 + $0x68] sm:$0xff] %v716
        %733 = vst [vmem:[#allocation2 + $0x70] sm:$0xff] %v717
        %734 = vst [vmem:[#allocation2 + $0x78] sm:$0xff] %v718
        %p735 = scmp.eq.s32.totalorder %s24, 1
        // Predicated region
        $region86: #{bottleneck_forward.5} parent=76 // pred_check
          %p736 = pneg %p735
        $region87: #{bottleneck_forward.5} parent=76 // pred_check_branch
          %738 = sbr.rel (%p736) target = $region89
        $region88: #{bottleneck_forward.5} parent=76 // pred_region
          %v739 = vld [vmem:[#allocation2] sm:$0xff]
          %v740 = vld [vmem:[#allocation2 + $0x8] sm:$0xff]
          %v741 = vld [vmem:[#allocation2 + $0x10] sm:$0xff]
          %v742 = vld [vmem:[#allocation2 + $0x18] sm:$0xff]
          %v743 = vld [vmem:[#allocation2 + $0x20] sm:$0xff]
          %v744 = vld [vmem:[#allocation2 + $0x28] sm:$0xff]
          %v745 = vld [vmem:[#allocation2 + $0x30] sm:$0xff]
          %v746 = vld [vmem:[#allocation2 + $0x38] sm:$0xff]
          %v747 = vld [vmem:[#allocation2 + $0x40] sm:$0xff]
          %v748 = vld [vmem:[#allocation2 + $0x48] sm:$0xff]
          %v749 = vld [vmem:[#allocation2 + $0x50] sm:$0xff]
          %v750 = vld [vmem:[#allocation2 + $0x58] sm:$0xff]
          %v751 = vld [vmem:[#allocation2 + $0x60] sm:$0xff]
          %v752 = vld [vmem:[#allocation2 + $0x68] sm:$0xff]
          %v753 = vld [vmem:[#allocation2 + $0x70] sm:$0xff]
          %v754 = vld [vmem:[#allocation2 + $0x78] sm:$0xff]
          %v755 = vld [vmem:[%s427] sm:$0x1]
          %v757 = vlaneseq
          %v758 = vshrl.u32 %v757, 7
          %v759 = vsub.s32 0, %v758
          %v760 = vrot.slane %v755, %v759
          %v762 = vmul.f32 %v739, %v760
          %v763 = vmul.f32 %v740, %v760
          %v764 = vmul.f32 %v741, %v760
          %v765 = vmul.f32 %v742, %v760
          %v766 = vmul.f32 %v743, %v760
          %v767 = vmul.f32 %v744, %v760
          %v768 = vmul.f32 %v745, %v760
          %v769 = vmul.f32 %v746, %v760
          %v770 = vmul.f32 %v747, %v760
          %v771 = vmul.f32 %v748, %v760
          %v772 = vmul.f32 %v749, %v760
          %v773 = vmul.f32 %v750, %v760
          %v774 = vmul.f32 %v751, %v760
          %v775 = vmul.f32 %v752, %v760
          %v776 = vmul.f32 %v753, %v760
          %v777 = vmul.f32 %v754, %v760
          %v778 = vld [vmem:[%s430] sm:$0x1]
          %v780 = vlaneseq
          %v781 = vshrl.u32 %v780, 7
          %v782 = vsub.s32 0, %v781
          %v783 = vrot.slane %v778, %v782
          %v785 = vadd.f32 %v762, %v783
          %v786 = vadd.f32 %v763, %v783
          %v787 = vadd.f32 %v764, %v783
          %v788 = vadd.f32 %v765, %v783
          %v789 = vadd.f32 %v766, %v783
          %v790 = vadd.f32 %v767, %v783
          %v791 = vadd.f32 %v768, %v783
          %v792 = vadd.f32 %v769, %v783
          %v793 = vadd.f32 %v770, %v783
          %v794 = vadd.f32 %v771, %v783
          %v795 = vadd.f32 %v772, %v783
          %v796 = vadd.f32 %v773, %v783
          %v797 = vadd.f32 %v774, %v783
          %v798 = vadd.f32 %v775, %v783
          %v799 = vadd.f32 %v776, %v783
          %v800 = vadd.f32 %v777, %v783
          %v801 = vmax.f32 %v785, 0.0
          %v802 = vmax.f32 %v786, 0.0
          %v803 = vmax.f32 %v787, 0.0
          %v804 = vmax.f32 %v788, 0.0
          %v805 = vmax.f32 %v789, 0.0
          %v806 = vmax.f32 %v790, 0.0
          %v807 = vmax.f32 %v791, 0.0
          %v808 = vmax.f32 %v792, 0.0
          %v809 = vmax.f32 %v793, 0.0
          %v810 = vmax.f32 %v794, 0.0
          %v811 = vmax.f32 %v795, 0.0
          %v812 = vmax.f32 %v796, 0.0
          %v813 = vmax.f32 %v797, 0.0
          %v814 = vmax.f32 %v798, 0.0
          %v815 = vmax.f32 %v799, 0.0
          %v816 = vmax.f32 %v800, 0.0
          %v817 = vld [vmem:[%s438] sm:$0xff]
          %v818 = vld [vmem:[%s438 + $0x8] sm:$0xff]
          %v819 = vld [vmem:[%s438 + $0x10] sm:$0xff]
          %v820 = vld [vmem:[%s438 + $0x18] sm:$0xff]
          %v821 = vld [vmem:[%s438 + $0x20] sm:$0xff]
          %v822 = vld [vmem:[%s438 + $0x28] sm:$0xff]
          %v823 = vld [vmem:[%s438 + $0x30] sm:$0xff]
          %v824 = vld [vmem:[%s438 + $0x38] sm:$0xff]
          %v825 = vld [vmem:[%s438 + $0x40] sm:$0xff]
          %v826 = vld [vmem:[%s438 + $0x48] sm:$0xff]
          %v827 = vld [vmem:[%s438 + $0x50] sm:$0xff]
          %v828 = vld [vmem:[%s438 + $0x58] sm:$0xff]
          %v829 = vld [vmem:[%s438 + $0x60] sm:$0xff]
          %v830 = vld [vmem:[%s438 + $0x68] sm:$0xff]
          %v831 = vld [vmem:[%s438 + $0x70] sm:$0xff]
          %v832 = vld [vmem:[%s438 + $0x78] sm:$0xff]
          %v833 = vadd.f32 %v801, %v817
          %v834 = vadd.f32 %v802, %v818
          %v835 = vadd.f32 %v803, %v819
          %v836 = vadd.f32 %v804, %v820
          %v837 = vadd.f32 %v805, %v821
          %v838 = vadd.f32 %v806, %v822
          %v839 = vadd.f32 %v807, %v823
          %v840 = vadd.f32 %v808, %v824
          %v841 = vadd.f32 %v809, %v825
          %v842 = vadd.f32 %v810, %v826
          %v843 = vadd.f32 %v811, %v827
          %v844 = vadd.f32 %v812, %v828
          %v845 = vadd.f32 %v813, %v829
          %v846 = vadd.f32 %v814, %v830
          %v847 = vadd.f32 %v815, %v831
          %v848 = vadd.f32 %v816, %v832
          %v849 = vmax.f32 %v833, 0.0
          %v850 = vmax.f32 %v834, 0.0
          %v851 = vmax.f32 %v835, 0.0
          %v852 = vmax.f32 %v836, 0.0
          %v853 = vmax.f32 %v837, 0.0
          %v854 = vmax.f32 %v838, 0.0
          %v855 = vmax.f32 %v839, 0.0
          %v856 = vmax.f32 %v840, 0.0
          %v857 = vmax.f32 %v841, 0.0
          %v858 = vmax.f32 %v842, 0.0
          %v859 = vmax.f32 %v843, 0.0
          %v860 = vmax.f32 %v844, 0.0
          %v861 = vmax.f32 %v845, 0.0
          %v862 = vmax.f32 %v846, 0.0
          %v863 = vmax.f32 %v847, 0.0
          %v864 = vmax.f32 %v848, 0.0
          %865 = vst [vmem:[#allocation4] sm:$0xff] %v849
          %866 = vst [vmem:[#allocation4 + $0x8] sm:$0xff] %v850
          %867 = vst [vmem:[#allocation4 + $0x10] sm:$0xff] %v851
          %868 = vst [vmem:[#allocation4 + $0x18] sm:$0xff] %v852
          %869 = vst [vmem:[#allocation4 + $0x20] sm:$0xff] %v853
          %870 = vst [vmem:[#allocation4 + $0x28] sm:$0xff] %v854
          %871 = vst [vmem:[#allocation4 + $0x30] sm:$0xff] %v855
          %872 = vst [vmem:[#allocation4 + $0x38] sm:$0xff] %v856
          %873 = vst [vmem:[#allocation4 + $0x40] sm:$0xff] %v857
          %874 = vst [vmem:[#allocation4 + $0x48] sm:$0xff] %v858
          %875 = vst [vmem:[#allocation4 + $0x50] sm:$0xff] %v859
          %876 = vst [vmem:[#allocation4 + $0x58] sm:$0xff] %v860
          %877 = vst [vmem:[#allocation4 + $0x60] sm:$0xff] %v861
          %878 = vst [vmem:[#allocation4 + $0x68] sm:$0xff] %v862
          %879 = vst [vmem:[#allocation4 + $0x70] sm:$0xff] %v863
          %880 = vst [vmem:[#allocation4 + $0x78] sm:$0xff] %v864
        $region89: #{bottleneck_forward.5} parent=76 // pred_fallthru
          _
        // Predicated region
        $region90: #{bottleneck_forward.5} parent=76 // pred_check
          %p881 = pneg %p192
        $region91: #{bottleneck_forward.5} parent=76 // pred_check_branch
          %883 = sbr.rel (%p881) target = $region93
        $region92: #{bottleneck_forward.5} parent=76 // pred_region
          %s884 = smul.u32 16, %s22
          %s886 = ssub.s32 2048, 2048
          %887 = vsyncadd [#allocation5], %s886
          %s888 = sadd.s32 %s23, %s884
          %s889 = smul.addr %s888, 128
          %s890 = scalar_lea.hbm %s5, %s889
          %s891 = sshll.u32 [#allocation4], 4
          %s892 = int_to_ptr.vmem [resolvable:$true] %s891
          %897 = dma.vmem_to_hbm [thread:$0]  %s892, 2048, %s890, [#allocation5], 128, 128, 8
        $region93: #{bottleneck_forward.5} parent=76 // pred_fallthru
          _
        // Predicated region
        $region94: #{bottleneck_forward.5} parent=76 // pred_check
          %p898 = pneg %p192
        $region95: #{bottleneck_forward.5} parent=76 // pred_check_branch
          %900 = sbr.rel (%p898) target = $region97
        $region96: #{bottleneck_forward.5} parent=76 // pred_region
          %901 = dma.done [#allocation5], 2048
        $region97: #{bottleneck_forward.5} parent=76 // pred_fallthru
          _
      $region77: #{bottleneck_forward.5} parent=5 // pred_fallthru
        _
      %p902 = scmp.le.s32.totalorder 2, %s12
      // Predicated region
      $region98: #{bottleneck_forward.5} parent=5 // pred_check
        %p903 = pneg %p902
      $region99: #{bottleneck_forward.5} parent=5 // pred_check_branch
        %905 = sbr.rel (%p903) target = $region101
      $region100: #{bottleneck_forward.5} parent=5 // pred_region
        %s906 = ssub.s32 %s12, 2
      $region101: #{bottleneck_forward.5} parent=5 // pred_fallthru
        _
    $region6: #{bottleneck_forward.5} parent=1 // loop_footer
      %s16 = sadd.s32 1, %s12
    $region7: #{bottleneck_forward.5} parent=1 // loop_footer_branch
      %11 = sbr.rel target = $region3
    $region8: #{bottleneck_forward.5} parent=1 // loop_exit
      _
    %907 = vsyncpa [#allocation5], 1
    %s908 = scalar_lea.sflag [#allocation5], 1
    %909 = vsyncpa %s908, 1

</llo_original>
